<compile_context>
chip_gen: v7x
topology: tpu7x:2x2x1
jax: 0.10.0
libtpu: 0.0.40
codegen_flags: <defaults>
</compile_context>

<pallas_src>
import math
import numpy as np
import jax
import jax.numpy as jnp
from jax.experimental import pallas as pl
from jax.experimental.pallas import tpu as pltpu


def _round_up(x, m):
    return ((x + m - 1) // m) * m


# ----------------------------------------------------------------------------
# Fused kernel: 4x GCN + bilinear discriminator for a tile of Bt batch elements
# ----------------------------------------------------------------------------
def _compgcn_kernel(seq_ref, adj_ref, diff_ref, wcat_ref, badj_ref, bdiff_ref,
                    wbt_ref, scal_ref, logits_ref, h1_ref, h2_ref):
    f32, bf16 = jnp.float32, jnp.bfloat16
    alpha1 = scal_ref[0, 0]            # PReLU slope of gcn1
    alpha2 = scal_ref[0, 1]            # PReLU slope of gcn2
    b_bil = scal_ref[0, 2]             # bilinear bias
    n_true = scal_ref[0, 3]            # number of valid (unpadded) nodes, f32

    _, Bt, Np, F = seq_ref.shape
    H2 = wcat_ref.shape[1]             # 2 * Hp
    Hp = H2 // 2

    # ---- ONE wide weight matmul for all four GCN passes --------------------
    # rows = {seq1, seq2} x batch x node, cols = [w1 | w2].  Np is a multiple
    # of 16, so the bf16 reshape is layout-preserving.
    seq2d = seq_ref[...].reshape(2 * Bt * Np, F)                       # bf16
    fts = jnp.dot(seq2d, wcat_ref[...], preferred_element_type=f32)    # (2BtNp, 2Hp)
    fts = fts.reshape(2, Bt, Np, H2).astype(bf16)

    # Re-pack so each propagation matmul is a single (Np, Np) @ (Np, 2*Hp):
    #   adj  @ [seq1@w1 | seq2@w1] -> [h1 | h3]
    #   diff @ [seq1@w2 | seq2@w2] -> [h2 | h4]
    # (Hp is a multiple of 128, so these concats are lane-aligned copies.)
    a_rhs = jnp.concatenate([fts[0, :, :, :Hp], fts[1, :, :, :Hp]], axis=-1)
    d_rhs = jnp.concatenate([fts[0, :, :, Hp:], fts[1, :, :, Hp:]], axis=-1)

    def prop(a, rhs, bias, alpha):
        out = jnp.einsum('bnm,bmh->bnh', a, rhs,
                         preferred_element_type=f32)                   # (Bt,Np,2Hp)
        out = out + bias                                               # f32
        return jnp.where(out > 0, out, alpha * out)                    # PReLU, f32

    adj_out = prop(adj_ref[...], a_rhs, badj_ref[...], alpha1)         # [h1 | h3]
    diff_out = prop(diff_ref[...], d_rhs, bdiff_ref[...], alpha2)      # [h2 | h4]

    h1 = adj_out[:, :, :Hp]                                            # (Bt,Np,Hp)
    h2 = diff_out[:, :, :Hp]
    # Lane-dense (Hp % 128 == 0) full-width stores.  TODO(synk): optionally
    # emit bf16 here if the consumer tolerates it (halves h writeback traffic).
    h1_ref[...] = h1.astype(h1_ref.dtype)
    h2_ref[...] = h2.astype(h2_ref.dtype)

    # Summary vectors: masked mean over the *true* nodes (rows >= n_true are
    # zero padding added by the wrapper).
    row = jax.lax.broadcasted_iota(jnp.int32, (1, Np, 1), 1).astype(f32)
    mask = (row < n_true).astype(f32)
    c1 = jax.nn.sigmoid(jnp.sum(h1 * mask, axis=1) / n_true)           # (Bt, Hp)
    c2 = jax.nn.sigmoid(jnp.sum(h2 * mask, axis=1) / n_true)

    # Bilinear trick: sc[n] = h[n] @ W_b @ c = h[n] . (c @ W_b^T).
    u1 = jnp.dot(c1, wbt_ref[...], preferred_element_type=f32)         # (Bt, Hp)
    u2 = jnp.dot(c2, wbt_ref[...], preferred_element_type=f32)

    def score(h, u):
        return jnp.sum(h * u[:, None, :], axis=2) + b_bil              # (Bt, Np)

    sc1 = score(h2, u1)                    # f_k(h2, c1)
    sc2 = score(h1, u2)                    # f_k(h1, c2)
    sc3 = score(diff_out[:, :, Hp:], u1)   # f_k(h4, c1)   (h4 dies here)
    sc4 = score(adj_out[:, :, Hp:], u2)    # f_k(h3, c2)   (h3 dies here)
    logits_ref[...] = jnp.stack([sc1, sc2, sc3, sc4],
                                axis=1).astype(logits_ref.dtype)       # (Bt,4,Np)


# ----------------------------------------------------------------------------
# Generation-aware VMEM budgeting
# ----------------------------------------------------------------------------
def _vmem_limit_bytes():
    cap = 64 * 1024 * 1024                    # v7x-safe fallback (64 MiB VMEM)
    try:
        cap = int(pltpu.get_tpu_info().vmem_capacity_bytes)
    except Exception:
        pass
    # Leave headroom under physical capacity for Mosaic-internal scratch.
    return int(min(100 * 1024 * 1024, cap * 3 // 4))


def _pick_batch_tile(B, Np, F, Hp, vmem_limit_bytes):
    """Largest divisor of B whose per-step VMEM footprint fits the budget,
    capped at B//2 so the parallel grid axis covers both v7x TensorCores."""
    bf, f4 = 2, 4
    H2 = 2 * Hp
    # Double-buffered input/output blocks (x2) + in-kernel intermediates.
    in_blk = 2 * bf * (2 * Np * F + 2 * Np * Np)          # seq1+seq2, adj, diff (bf16)
    out_blk = 2 * f4 * (4 * Np + 2 * Np * Hp)             # logits + h1/h2 (f32)
    inter = Np * H2 * (2 * f4 + 2 * bf + 2 * bf + 2 * f4) \
        + 4 * Np * Hp * f4                                # fts f32+bf16, rhs, outs, slices
    per_b = in_blk + out_blk + inter
    resident = 2 * (F * H2 * bf + 2 * H2 * f4 + Hp * Hp * f4)   # weights (double-buffered)
    budget = max(int(0.8 * vmem_limit_bytes) - resident, per_b)
    bt = max(1, min(B, budget // max(per_b, 1)))
    if B >= 2:
        bt = min(bt, max(1, B // 2))   # grid >= 2 -> both v7x TCs get work
    while B % bt:
        bt -= 1
    return bt


# ----------------------------------------------------------------------------
# Full CompGCN forward (dropout is declared but unused in the torch forward).
# ----------------------------------------------------------------------------
def compgcn_forward(seq1, seq2, adj, diff, params, *, batch_tile=None):
    f32, bf16 = jnp.float32, jnp.bfloat16
    B, N, F = seq1.shape
    H = params["w1"].shape[1]
    Hp = _round_up(H, 128)     # lane-dense h stores / full-width MXU tiles
    Np = _round_up(N, 16)      # bf16 sublane packing -> layout-preserving reshape
    pad_n, pad_h = Np - N, Hp - H

    # ---- data: stack seq1/seq2, zero-pad nodes, cast to bf16 once ----------
    seq_all = jnp.stack([seq1, seq2], axis=0)              # (2, B, N, F)
    adj_p, diff_p = adj, diff
    if pad_n:
        seq_all = jnp.pad(seq_all, ((0, 0), (0, 0), (0, pad_n), (0, 0)))
        adj_p = jnp.pad(adj_p, ((0, 0), (0, pad_n), (0, pad_n)))
        diff_p = jnp.pad(diff_p, ((0, 0), (0, pad_n), (0, pad_n)))
    seq_all = seq_all.astype(bf16)
    adj_p = adj_p.astype(bf16)
    diff_p = diff_p.astype(bf16)

    # ---- params: pad H, pre-concat [w1|w2] bf16, pre-transpose W_b ---------
    def pad_w(w):                                   # (F, H) -> (F, Hp)
        w = w.astype(f32)
        return jnp.pad(w, ((0, 0), (0, pad_h))) if pad_h else w

    def pad_b(b):                                   # (H,) -> (1, Hp)
        b = b.astype(f32).reshape(1, H)
        return jnp.pad(b, ((0, 0), (0, pad_h))) if pad_h else b

    w_cat = jnp.concatenate([pad_w(params["w1"]), pad_w(params["w2"])],
                            axis=1).astype(bf16)            # (F, 2*Hp)
    b1p, b2p = pad_b(params["b1"]), pad_b(params["b2"])
    b_adj = jnp.concatenate([b1p, b1p], axis=1)              # bias for [h1 | h3]
    b_diff = jnp.concatenate([b2p, b2p], axis=1)             # bias for [h2 | h4]
    wbt = params["w_bil"].T.astype(f32)                      # (H, H) -> W_b^T
    if pad_h:
        wbt = jnp.pad(wbt, ((0, pad_h), (0, pad_h)))         # (Hp, Hp)
    scal = jnp.stack([
        jnp.asarray(params["alpha1"], f32),
        jnp.asarray(params["alpha2"], f32),
        jnp.asarray(params["b_bil"], f32),
        jnp.asarray(float(N), f32),
    ]).reshape(1, 4)

    vmem_limit = _vmem_limit_bytes()
    Bt = (_pick_batch_tile(B, Np, F, Hp, vmem_limit)
          if batch_tile is None else batch_tile)
    assert B % Bt == 0, "batch_tile must divide the batch size"
    grid = (B // Bt,)

    def batch3(shape):
        return pl.BlockSpec((Bt,) + shape, lambda i: (i, 0, 0))

    def full2(shape):
        return pl.BlockSpec(shape, lambda i: (0, 0))

    logits3, h1p, h2p = pl.pallas_call(
        _compgcn_kernel,
        out_shape=(
            jax.ShapeDtypeStruct((B, 4, Np), f32),
            jax.ShapeDtypeStruct((B, Np, Hp), f32),
            jax.ShapeDtypeStruct((B, Np, Hp), f32),
        ),
        grid_spec=pltpu.PrefetchScalarGridSpec(
            num_scalar_prefetch=0,
            grid=grid,
            in_specs=[
                pl.BlockSpec((2, Bt, Np, F), lambda i: (0, i, 0, 0)),  # seq1|seq2 (bf16)
                batch3((Np, Np)),                                       # adj  (bf16)
                batch3((Np, Np)),                                       # diff (bf16)
                full2((F, 2 * Hp)),                                     # [w1|w2] (bf16)
                full2((1, 2 * Hp)),                                     # bias [b1|b1]
                full2((1, 2 * Hp)),                                     # bias [b2|b2]
                full2((Hp, Hp)),                                        # W_b^T
                pl.BlockSpec(memory_space=pltpu.SMEM),                  # scalars
            ],
            out_specs=[
                batch3((4, Np)),                                        # logits
                batch3((Np, Hp)),                                       # h_1
                batch3((Np, Hp)),                                       # h_2
            ],
        ),
        compiler_params=pltpu.CompilerParams(
            dimension_semantics=("parallel",),
            vmem_limit_bytes=vmem_limit,
        ),
    )(seq_all, adj_p, diff_p, w_cat, b_adj, b_diff, wbt, scal)

    logits = logits3[:, :, :N].reshape(B, 4 * N)
    return logits, h1p[:, :N, :H], h2p[:, :N, :H]


# ----------------------------------------------------------------------------
# Deterministic parameter init (mirrors torch init shapes / schemes)
# ----------------------------------------------------------------------------
def init_params(key, n_in, n_h):
    k1, k2, k3 = jax.random.split(key, 3)
    bound_lin = math.sqrt(6.0 / (n_in + n_h))
    w1_t = jax.random.uniform(k1, (n_h, n_in), jnp.float32, -bound_lin, bound_lin)
    w2_t = jax.random.uniform(k2, (n_h, n_in), jnp.float32, -bound_lin, bound_lin)
    bound_bil = math.sqrt(6.0 / (n_h * n_h + n_h))
    w_bil = jax.random.uniform(k3, (n_h, n_h), jnp.float32, -bound_bil, bound_bil)
    return {
        "w1": w1_t.T,                      # used as seq @ W == seq @ weight^T
        "b1": jnp.zeros((n_h,), jnp.float32),
        "alpha1": jnp.float32(0.25),       # nn.PReLU() default
        "w2": w2_t.T,
        "b2": jnp.zeros((n_h,), jnp.float32),
        "alpha2": jnp.float32(0.25),
        "w_bil": w_bil,
        "b_bil": jnp.float32(0.0),
    }


# ----------------------------------------------------------------------------
# Pure-JAX reference for correctness checking (f32 throughout)
# ----------------------------------------------------------------------------
def _ref_gcn(seq, adj, w, b, alpha):
    out = jnp.einsum("bnm,bmh->bnh", adj, seq @ w) + b
    h = jnp.where(out > 0, out, alpha * out)
    c = jax.nn.sigmoid(jnp.mean(h, axis=1))
    return h, c


def _ref_forward(seq1, seq2, adj, diff, p):
    h1, c1 = _ref_gcn(seq1, adj,  p["w1"], p["b1"], p["alpha1"])
    h2, c2 = _ref_gcn(seq1, diff, p["w2"], p["b2"], p["alpha2"])
    h3, _ = _ref_gcn(seq2, adj,  p["w1"], p["b1"], p["alpha1"])
    h4, _ = _ref_gcn(seq2, diff, p["w2"], p["b2"], p["alpha2"])

    def score(h, c):
        return jnp.einsum("bnh,hk,bk->bn", h, p["w_bil"], c) + p["b_bil"]

    logits = jnp.concatenate(
        [score(h2, c1), score(h1, c2), score(h4, c1), score(h3, c2)], axis=1)
    return logits, h1, h2


if __name__ == "__main__":
    B, N, n_in, n_h = 2, 8, 16, 32
    key = jax.random.PRNGKey(0)
    kp, ks1, ks2, ka, kd = jax.random.split(key, 5)

    params = init_params(kp, n_in, n_h)
    seq1 = jax.random.normal(ks1, (B, N, n_in), jnp.float32)
    seq2 = jax.random.normal(ks2, (B, N, n_in), jnp.float32)
    adj = jax.random.uniform(ka, (B, N, N), jnp.float32)
    diff = jax.random.uniform(kd, (B, N, N), jnp.float32)

    logits, h_1, h_2 = compgcn_forward(seq1, seq2, adj, diff, params)
    jax.block_until_ready((logits, h_1, h_2))

    ref_logits, ref_h1, ref_h2 = _ref_forward(seq1, seq2, adj, diff, params)
    # Precision contract: bf16 MXU operands with f32 accumulation.
    np.testing.assert_allclose(np.asarray(logits), np.asarray(ref_logits),
                               rtol=2e-2, atol=2e-2)
    np.testing.assert_allclose(np.asarray(h_1), np.asarray(ref_h1),
                               rtol=2e-2, atol=2e-2)
    np.testing.assert_allclose(np.asarray(h_2), np.asarray(ref_h2),
                               rtol=2e-2, atol=2e-2)

    assert logits.shape == (B, 4 * N)
    assert h_1.shape == (B, N, n_h) and h_2.shape == (B, N, n_h)
    print("KERNEL_OK")
</pallas_src>

<mosaic_0001>
module attributes {stable_mosaic.version = 11 : i64} {
  func.func @_compgcn_kernel(%arg0: i32, %arg1: memref<2x1x16x16xbf16, #tpu.memory_space<vmem>>, %arg2: memref<1x16x16xbf16, #tpu.memory_space<vmem>>, %arg3: memref<1x16x16xbf16, #tpu.memory_space<vmem>>, %arg4: memref<16x256xbf16, #tpu.memory_space<vmem>>, %arg5: memref<1x256xf32, #tpu.memory_space<vmem>>, %arg6: memref<1x256xf32, #tpu.memory_space<vmem>>, %arg7: memref<128x128xf32, #tpu.memory_space<vmem>>, %arg8: memref<1x4xf32, #tpu.memory_space<smem>>, %arg9: memref<1x4x16xf32, #tpu.memory_space<vmem>>, %arg10: memref<1x16x128xf32, #tpu.memory_space<vmem>>, %arg11: memref<1x16x128xf32, #tpu.memory_space<vmem>>) attributes {dimension_semantics = [#tpu.dimension_semantics<parallel>], iteration_bounds = array<i64: 2>, scalar_prefetch = 0 : i64, scratch_operands = 0 : i64, tpu.core_type = #tpu.core_type<tc>, window_params = [{transform_indices = @transform_0, window_bounds = array<i64: 2, 1, 16, 16>}, {transform_indices = @transform_1, window_bounds = array<i64: 1, 16, 16>}, {transform_indices = @transform_2, window_bounds = array<i64: 1, 16, 16>}, {pipeline_mode = #tpu.pipeline_mode<synchronous>, transform_indices = @transform_3, window_bounds = array<i64: 16, 256>}, {pipeline_mode = #tpu.pipeline_mode<synchronous>, transform_indices = @transform_4, window_bounds = array<i64: 1, 256>}, {pipeline_mode = #tpu.pipeline_mode<synchronous>, transform_indices = @transform_5, window_bounds = array<i64: 1, 256>}, {pipeline_mode = #tpu.pipeline_mode<synchronous>, transform_indices = @transform_6, window_bounds = array<i64: 128, 128>}, {transform_indices = @transform_7, window_bounds = array<i64: 1, 4>}, {transform_indices = @transform_8, window_bounds = array<i64: 1, 4, 16>}, {transform_indices = @transform_9, window_bounds = array<i64: 1, 16, 128>}, {transform_indices = @transform_10, window_bounds = array<i64: 1, 16, 128>}]} {
    %c0 = arith.constant 0 : index
    %c0_0 = arith.constant 0 : index
    %0 = memref.load %arg8[%c0, %c0_0] : memref<1x4xf32, #tpu.memory_space<smem>>
    %c0_1 = arith.constant 0 : index
    %c1 = arith.constant 1 : index
    %1 = memref.load %arg8[%c0_1, %c1] : memref<1x4xf32, #tpu.memory_space<smem>>
    %c0_2 = arith.constant 0 : index
    %c2 = arith.constant 2 : index
    %2 = memref.load %arg8[%c0_2, %c2] : memref<1x4xf32, #tpu.memory_space<smem>>
    %c0_3 = arith.constant 0 : index
    %c3 = arith.constant 3 : index
    %3 = memref.load %arg8[%c0_3, %c3] : memref<1x4xf32, #tpu.memory_space<smem>>
    %c0_4 = arith.constant 0 : index
    %c0_5 = arith.constant 0 : index
    %c0_6 = arith.constant 0 : index
    %c0_7 = arith.constant 0 : index
    %4 = vector.load %arg1[%c0_4, %c0_5, %c0_6, %c0_7] : memref<2x1x16x16xbf16, #tpu.memory_space<vmem>>, vector<2x1x16x16xbf16>
    %5 = vector.shape_cast %4 : vector<2x1x16x16xbf16> to vector<32x16xbf16>
    %c0_8 = arith.constant 0 : index
    %c0_9 = arith.constant 0 : index
    %6 = vector.load %arg4[%c0_8, %c0_9] : memref<16x256xbf16, #tpu.memory_space<vmem>>, vector<16x256xbf16>
    %cst = arith.constant dense<0.000000e+00> : vector<32x256xf32>
    %7 = tpu.matmul %5, %6, %cst {dimension_numbers = #tpu.dot_dimension_numbers<[1], [0], [0], [1], [0, 0, 1, 1], [], []>} : vector<32x16xbf16>, vector<16x256xbf16>, vector<32x256xf32> -> vector<32x256xf32>
    %8 = vector.shape_cast %7 : vector<32x256xf32> to vector<2x1x16x256xf32>
    %9 = arith.truncf %8 : vector<2x1x16x256xf32> to vector<2x1x16x256xbf16>
    %10 = vector.extract_strided_slice %9 {offsets = [0, 0, 0, 0], sizes = [1, 1, 16, 128], strides = [1, 1, 1, 1]} : vector<2x1x16x256xbf16> to vector<1x1x16x128xbf16>
    %11 = vector.shape_cast %10 : vector<1x1x16x128xbf16> to vector<1x16x128xbf16>
    %12 = vector.extract_strided_slice %9 {offsets = [1, 0, 0, 0], sizes = [1, 1, 16, 128], strides = [1, 1, 1, 1]} : vector<2x1x16x256xbf16> to vector<1x1x16x128xbf16>
    %13 = vector.shape_cast %12 : vector<1x1x16x128xbf16> to vector<1x16x128xbf16>
    %14 = tpu.concatenate %11, %13 in 2 : vector<1x16x128xbf16>, vector<1x16x128xbf16> -> vector<1x16x256xbf16>
    %15 = vector.extract_strided_slice %9 {offsets = [0, 0, 0, 128], sizes = [1, 1, 16, 128], strides = [1, 1, 1, 1]} : vector<2x1x16x256xbf16> to vector<1x1x16x128xbf16>
    %16 = vector.shape_cast %15 : vector<1x1x16x128xbf16> to vector<1x16x128xbf16>
    %17 = vector.extract_strided_slice %9 {offsets = [1, 0, 0, 128], sizes = [1, 1, 16, 128], strides = [1, 1, 1, 1]} : vector<2x1x16x256xbf16> to vector<1x1x16x128xbf16>
    %18 = vector.shape_cast %17 : vector<1x1x16x128xbf16> to vector<1x16x128xbf16>
    %19 = tpu.concatenate %16, %18 in 2 : vector<1x16x128xbf16>, vector<1x16x128xbf16> -> vector<1x16x256xbf16>
    %c0_10 = arith.constant 0 : index
    %c0_11 = arith.constant 0 : index
    %c0_12 = arith.constant 0 : index
    %20 = vector.load %arg2[%c0_10, %c0_11, %c0_12] : memref<1x16x16xbf16, #tpu.memory_space<vmem>>, vector<1x16x16xbf16>
    %c0_13 = arith.constant 0 : index
    %c0_14 = arith.constant 0 : index
    %21 = vector.load %arg5[%c0_13, %c0_14] : memref<1x256xf32, #tpu.memory_space<vmem>>, vector<1x256xf32>
    "tpu.trace_start"() <{level = 10 : i32, message = "bnm,bmh->bnh"}> : () -> ()
    %cst_15 = arith.constant dense<0.000000e+00> : vector<1x16x256xf32>
    %22 = tpu.matmul %20, %14, %cst_15 {dimension_numbers = #tpu.dot_dimension_numbers<[2], [1], [1], [2], [0, 0, 0, 1, 1, 2], [0], [0]>} : vector<1x16x16xbf16>, vector<1x16x256xbf16>, vector<1x16x256xf32> -> vector<1x16x256xf32>
    "tpu.trace_stop"() : () -> ()
    %23 = vector.shape_cast %21 : vector<1x256xf32> to vector<1x1x256xf32>
    %24 = vector.broadcast %23 : vector<1x1x256xf32> to vector<1x16x256xf32>
    %25 = arith.addf %22, %24 : vector<1x16x256xf32>
    %cst_16 = arith.constant 0.000000e+00 : f32
    %26 = vector.broadcast %cst_16 : f32 to vector<1x16x256xf32>
    %27 = arith.cmpf ogt, %25, %26 : vector<1x16x256xf32>
    %28 = vector.broadcast %0 : f32 to vector<1x16x256xf32>
    %29 = arith.mulf %28, %25 : vector<1x16x256xf32>
    %30 = arith.select %27, %25, %29 : vector<1x16x256xi1>, vector<1x16x256xf32>
    %c0_17 = arith.constant 0 : index
    %c0_18 = arith.constant 0 : index
    %c0_19 = arith.constant 0 : index
    %31 = vector.load %arg3[%c0_17, %c0_18, %c0_19] : memref<1x16x16xbf16, #tpu.memory_space<vmem>>, vector<1x16x16xbf16>
    %c0_20 = arith.constant 0 : index
    %c0_21 = arith.constant 0 : index
    %32 = vector.load %arg6[%c0_20, %c0_21] : memref<1x256xf32, #tpu.memory_space<vmem>>, vector<1x256xf32>
    "tpu.trace_start"() <{level = 10 : i32, message = "bnm,bmh->bnh"}> : () -> ()
    %cst_22 = arith.constant dense<0.000000e+00> : vector<1x16x256xf32>
    %33 = tpu.matmul %31, %19, %cst_22 {dimension_numbers = #tpu.dot_dimension_numbers<[2], [1], [1], [2], [0, 0, 0, 1, 1, 2], [0], [0]>} : vector<1x16x16xbf16>, vector<1x16x256xbf16>, vector<1x16x256xf32> -> vector<1x16x256xf32>
    "tpu.trace_stop"() : () -> ()
    %34 = vector.shape_cast %32 : vector<1x256xf32> to vector<1x1x256xf32>
    %35 = vector.broadcast %34 : vector<1x1x256xf32> to vector<1x16x256xf32>
    %36 = arith.addf %33, %35 : vector<1x16x256xf32>
    %cst_23 = arith.constant 0.000000e+00 : f32
    %37 = vector.broadcast %cst_23 : f32 to vector<1x16x256xf32>
    %38 = arith.cmpf ogt, %36, %37 : vector<1x16x256xf32>
    %39 = vector.broadcast %1 : f32 to vector<1x16x256xf32>
    %40 = arith.mulf %39, %36 : vector<1x16x256xf32>
    %41 = arith.select %38, %36, %40 : vector<1x16x256xi1>, vector<1x16x256xf32>
    %42 = vector.extract_strided_slice %30 {offsets = [0, 0, 0], sizes = [1, 16, 128], strides = [1, 1, 1]} : vector<1x16x256xf32> to vector<1x16x128xf32>
    %43 = vector.extract_strided_slice %41 {offsets = [0, 0, 0], sizes = [1, 16, 128], strides = [1, 1, 1]} : vector<1x16x256xf32> to vector<1x16x128xf32>
    %c0_24 = arith.constant 0 : index
    %c0_25 = arith.constant 0 : index
    %c0_26 = arith.constant 0 : index
    %44 = vector.load %arg10[%c0_24, %c0_25, %c0_26] : memref<1x16x128xf32, #tpu.memory_space<vmem>>, vector<1x16x128xf32>
    tpu.vector_store %arg10[%c0_24, %c0_25, %c0_26], %42 {strides = array<i32>} : memref<1x16x128xf32, #tpu.memory_space<vmem>>, vector<1x16x128xf32>,
    %c0_27 = arith.constant 0 : index
    %c0_28 = arith.constant 0 : index
    %c0_29 = arith.constant 0 : index
    %45 = vector.load %arg11[%c0_27, %c0_28, %c0_29] : memref<1x16x128xf32, #tpu.memory_space<vmem>>, vector<1x16x128xf32>
    tpu.vector_store %arg11[%c0_27, %c0_28, %c0_29], %43 {strides = array<i32>} : memref<1x16x128xf32, #tpu.memory_space<vmem>>, vector<1x16x128xf32>,
    %46 = tpu.iota {dimensions = array<i32: 1>} : vector<1x16x1xi32>
    %47 = arith.sitofp %46 : vector<1x16x1xi32> to vector<1x16x1xf32>
    %48 = vector.broadcast %3 : f32 to vector<1x16x1xf32>
    %49 = arith.cmpf olt, %47, %48 : vector<1x16x1xf32>
    %50 = arith.extui %49 : vector<1x16x1xi1> to vector<1x16x1xi32>
    %51 = arith.sitofp %50 : vector<1x16x1xi32> to vector<1x16x1xf32>
    %52 = vector.broadcast %51 : vector<1x16x1xf32> to vector<1x16x128xf32>
    %53 = arith.mulf %42, %52 : vector<1x16x128xf32>
    %cst_30 = arith.constant dense<0.000000e+00> : vector<1x128xf32>
    %54 = vector.multi_reduction <add>, %53, %cst_30 [1] : vector<1x16x128xf32> to vector<1x128xf32>
    %55 = vector.broadcast %3 : f32 to vector<1x128xf32>
    %56 = arith.divf %54, %55 : vector<1x128xf32>
    %57 = arith.negf %56 : vector<1x128xf32>
    %58 = math.exp %57 : vector<1x128xf32>
    %cst_31 = arith.constant 1.000000e+00 : f32
    %59 = vector.broadcast %cst_31 : f32 to vector<1x128xf32>
    %60 = arith.addf %59, %58 : vector<1x128xf32>
    %61 = arith.divf %59, %60 : vector<1x128xf32>
    %62 = vector.broadcast %51 : vector<1x16x1xf32> to vector<1x16x128xf32>
    %63 = arith.mulf %43, %62 : vector<1x16x128xf32>
    %cst_32 = arith.constant dense<0.000000e+00> : vector<1x128xf32>
    %64 = vector.multi_reduction <add>, %63, %cst_32 [1] : vector<1x16x128xf32> to vector<1x128xf32>
    %65 = vector.broadcast %3 : f32 to vector<1x128xf32>
    %66 = arith.divf %64, %65 : vector<1x128xf32>
    %67 = arith.negf %66 : vector<1x128xf32>
    %68 = math.exp %67 : vector<1x128xf32>
    %cst_33 = arith.constant 1.000000e+00 : f32
    %69 = vector.broadcast %cst_33 : f32 to vector<1x128xf32>
    %70 = arith.addf %69, %68 : vector<1x128xf32>
    %71 = arith.divf %69, %70 : vector<1x128xf32>
    %c0_34 = arith.constant 0 : index
    %c0_35 = arith.constant 0 : index
    %72 = vector.load %arg7[%c0_34, %c0_35] : memref<128x128xf32, #tpu.memory_space<vmem>>, vector<128x128xf32>
    %cst_36 = arith.constant dense<0.000000e+00> : vector<1x128xf32>
    %73 = tpu.matmul %61, %72, %cst_36 {dimension_numbers = #tpu.dot_dimension_numbers<[1], [0], [0], [1], [0, 0, 1, 1], [], []>} : vector<1x128xf32>, vector<128x128xf32>, vector<1x128xf32> -> vector<1x128xf32>
    %c0_37 = arith.constant 0 : index
    %c0_38 = arith.constant 0 : index
    %74 = vector.load %arg7[%c0_37, %c0_38] : memref<128x128xf32, #tpu.memory_space<vmem>>, vector<128x128xf32>
    %cst_39 = arith.constant dense<0.000000e+00> : vector<1x128xf32>
    %75 = tpu.matmul %71, %74, %cst_39 {dimension_numbers = #tpu.dot_dimension_numbers<[1], [0], [0], [1], [0, 0, 1, 1], [], []>} : vector<1x128xf32>, vector<128x128xf32>, vector<1x128xf32> -> vector<1x128xf32>
    %76 = vector.shape_cast %73 : vector<1x128xf32> to vector<1x1x128xf32>
    %77 = vector.broadcast %76 : vector<1x1x128xf32> to vector<1x16x128xf32>
    %78 = arith.mulf %43, %77 : vector<1x16x128xf32>
    %cst_40 = arith.constant dense<0.000000e+00> : vector<1x16xf32>
    %79 = vector.multi_reduction <add>, %78, %cst_40 [2] : vector<1x16x128xf32> to vector<1x16xf32>
    %80 = vector.broadcast %2 : f32 to vector<1x16xf32>
    %81 = arith.addf %79, %80 : vector<1x16xf32>
    %82 = vector.shape_cast %75 : vector<1x128xf32> to vector<1x1x128xf32>
    %83 = vector.broadcast %82 : vector<1x1x128xf32> to vector<1x16x128xf32>
    %84 = arith.mulf %42, %83 : vector<1x16x128xf32>
    %cst_41 = arith.constant dense<0.000000e+00> : vector<1x16xf32>
    %85 = vector.multi_reduction <add>, %84, %cst_41 [2] : vector<1x16x128xf32> to vector<1x16xf32>
    %86 = vector.broadcast %2 : f32 to vector<1x16xf32>
    %87 = arith.addf %85, %86 : vector<1x16xf32>
    %88 = vector.extract_strided_slice %41 {offsets = [0, 0, 128], sizes = [1, 16, 128], strides = [1, 1, 1]} : vector<1x16x256xf32> to vector<1x16x128xf32>
    %89 = vector.shape_cast %73 : vector<1x128xf32> to vector<1x1x128xf32>
    %90 = vector.broadcast %89 : vector<1x1x128xf32> to vector<1x16x128xf32>
    %91 = arith.mulf %88, %90 : vector<1x16x128xf32>
    %cst_42 = arith.constant dense<0.000000e+00> : vector<1x16xf32>
    %92 = vector.multi_reduction <add>, %91, %cst_42 [2] : vector<1x16x128xf32> to vector<1x16xf32>
    %93 = vector.broadcast %2 : f32 to vector<1x16xf32>
    %94 = arith.addf %92, %93 : vector<1x16xf32>
    %95 = vector.extract_strided_slice %30 {offsets = [0, 0, 128], sizes = [1, 16, 128], strides = [1, 1, 1]} : vector<1x16x256xf32> to vector<1x16x128xf32>
    %96 = vector.shape_cast %75 : vector<1x128xf32> to vector<1x1x128xf32>
    %97 = vector.broadcast %96 : vector<1x1x128xf32> to vector<1x16x128xf32>
    %98 = arith.mulf %95, %97 : vector<1x16x128xf32>
    %cst_43 = arith.constant dense<0.000000e+00> : vector<1x16xf32>
    %99 = vector.multi_reduction <add>, %98, %cst_43 [2] : vector<1x16x128xf32> to vector<1x16xf32>
    %100 = vector.broadcast %2 : f32 to vector<1x16xf32>
    %101 = arith.addf %99, %100 : vector<1x16xf32>
    %102 = vector.shape_cast %81 : vector<1x16xf32> to vector<1x1x16xf32>
    %103 = vector.shape_cast %87 : vector<1x16xf32> to vector<1x1x16xf32>
    %104 = vector.shape_cast %94 : vector<1x16xf32> to vector<1x1x16xf32>
    %105 = vector.shape_cast %101 : vector<1x16xf32> to vector<1x1x16xf32>
    %106 = tpu.concatenate %102, %103, %104, %105 in 1 : vector<1x1x16xf32>, vector<1x1x16xf32>, vector<1x1x16xf32>, vector<1x1x16xf32> -> vector<1x4x16xf32>
    %c0_44 = arith.constant 0 : index
    %c0_45 = arith.constant 0 : index
    %c0_46 = arith.constant 0 : index
    %107 = vector.load %arg9[%c0_44, %c0_45, %c0_46] : memref<1x4x16xf32, #tpu.memory_space<vmem>>, vector<1x4x16xf32>
    tpu.vector_store %arg9[%c0_44, %c0_45, %c0_46], %106 {strides = array<i32>} : memref<1x4x16xf32, #tpu.memory_space<vmem>>, vector<1x4x16xf32>,
    return
  }
  func.func @transform_0(%arg0: i32) -> (i32, i32, i32, i32) {
    %c0_i32 = arith.constant 0 : i32
    %c0_i32_0 = arith.constant 0 : i32
    %c0_i32_1 = arith.constant 0 : i32
    %c0_i32_2 = arith.constant 0 : i32
    return %c0_i32, %arg0, %c0_i32_0, %c0_i32_1 : i32, i32, i32, i32
  }
  func.func @transform_1(%arg0: i32) -> (i32, i32, i32) {
    %c0_i32 = arith.constant 0 : i32
    %c0_i32_0 = arith.constant 0 : i32
    %c0_i32_1 = arith.constant 0 : i32
    return %arg0, %c0_i32, %c0_i32_0 : i32, i32, i32
  }
  func.func @transform_2(%arg0: i32) -> (i32, i32, i32) {
    %c0_i32 = arith.constant 0 : i32
    %c0_i32_0 = arith.constant 0 : i32
    %c0_i32_1 = arith.constant 0 : i32
    return %arg0, %c0_i32, %c0_i32_0 : i32, i32, i32
  }
  func.func @transform_3(%arg0: i32) -> (i32, i32) {
    %c0_i32 = arith.constant 0 : i32
    %c0_i32_0 = arith.constant 0 : i32
    %c0_i32_1 = arith.constant 0 : i32
    return %c0_i32, %c0_i32_0 : i32, i32
  }
  func.func @transform_4(%arg0: i32) -> (i32, i32) {
    %c0_i32 = arith.constant 0 : i32
    %c0_i32_0 = arith.constant 0 : i32
    %c0_i32_1 = arith.constant 0 : i32
    return %c0_i32, %c0_i32_0 : i32, i32
  }
  func.func @transform_5(%arg0: i32) -> (i32, i32) {
    %c0_i32 = arith.constant 0 : i32
    %c0_i32_0 = arith.constant 0 : i32
    %c0_i32_1 = arith.constant 0 : i32
    return %c0_i32, %c0_i32_0 : i32, i32
  }
  func.func @transform_6(%arg0: i32) -> (i32, i32) {
    %c0_i32 = arith.constant 0 : i32
    %c0_i32_0 = arith.constant 0 : i32
    %c0_i32_1 = arith.constant 0 : i32
    return %c0_i32, %c0_i32_0 : i32, i32
  }
  func.func @transform_7(%arg0: i32) -> (i32, i32) {
    %c0_i32 = arith.constant 0 : i32
    %c0_i32_0 = arith.constant 0 : i32
    %c0_i32_1 = arith.constant 0 : i32
    return %c0_i32, %c0_i32_0 : i32, i32
  }
  func.func @transform_8(%arg0: i32) -> (i32, i32, i32) {
    %c0_i32 = arith.constant 0 : i32
    %c0_i32_0 = arith.constant 0 : i32
    %c0_i32_1 = arith.constant 0 : i32
    return %arg0, %c0_i32, %c0_i32_0 : i32, i32, i32
  }
  func.func @transform_9(%arg0: i32) -> (i32, i32, i32) {
    %c0_i32 = arith.constant 0 : i32
    %c0_i32_0 = arith.constant 0 : i32
    %c0_i32_1 = arith.constant 0 : i32
    return %arg0, %c0_i32, %c0_i32_0 : i32, i32, i32
  }
  func.func @transform_10(%arg0: i32) -> (i32, i32, i32) {
    %c0_i32 = arith.constant 0 : i32
    %c0_i32_0 = arith.constant 0 : i32
    %c0_i32_1 = arith.constant 0 : i32
    return %arg0, %c0_i32, %c0_i32_0 : i32, i32, i32
  }
}

</mosaic_0001>

<llo_original>
// kernel: tpu_custom_call.1
$region0: #{tpu_custom_call.1}
  #allocation0 [shape = 'u32[]', space=smem, size = 0x4, offset = 0x4, fixed_abs, tag = 'smem constant byte address 0x4 - core index']
  #allocation1 [shape = 'u32[144,128]{1,0:T(1,128)}', space=vmem, size = 0x12000, scoped, tag = 'internal scratch']
  #allocation17 [shape = 's32[]', space=sflag, size = 0x4, offset = 0, fixed_abs, tag = 'sflag constant byte address 0x0 - dummy sync flag']
  %s0 = inlined_call_operand.hbm [shape: bf16[2,2,16,16], index: 0, kind: input, shape index: {}]
  %s1 = inlined_call_operand.hbm [shape: bf16[2,16,16], index: 1, kind: input, shape index: {}]
  %s2 = inlined_call_operand.hbm [shape: bf16[2,16,16], index: 2, kind: input, shape index: {}]
  %s3 = inlined_call_operand.hbm [shape: bf16[16,256], index: 3, kind: input, shape index: {}]
  %s4 = inlined_call_operand.vmem [shape: f32[1,256], index: 4, kind: input, shape index: {}]
  %s5 = inlined_call_operand.vmem [shape: f32[1,256], index: 5, kind: input, shape index: {}]
  %s6 = inlined_call_operand.hbm [shape: f32[128,128], index: 6, kind: input, shape index: {}]
  %s7 = inlined_call_operand.vmem [shape: f32[1,4], index: 7, kind: input, shape index: {}]
  %s8 = inlined_call_operand.hbm [shape: f32[2,4,16], index: 8, kind: output, shape index: {0}]
  %s9 = inlined_call_operand.hbm [shape: f32[2,16,128], index: 9, kind: output, shape index: {1}]
  %s10 = inlined_call_operand.hbm [shape: f32[2,16,128], index: 10, kind: output, shape index: {2}]
  %11 = xla_tuple %s8, %s9, %s10
  %s12 = sld [smem:[#allocation0]]
  $region105: #{tpu_custom_call.1} parent=0
    _
  %s14 = ssub.s32 1, %s12
  %s15 = scalar_select 0, %s14, %s12
  $region1: #{tpu_custom_call.1} parent=0
    #allocation2 [shape = 'u8[16384]{0}', space=vmem, size = 0x4000, scoped, tag = 'input window, operand 0']
    #allocation3 [shape = 's32[2]{0}', space=sflag, size = 0x8, scoped, tag = 'scoped memory for tpu_custom_call.1']
    #allocation4 [shape = 's32[2]{0}', space=sflag, size = 0x8, scoped, tag = 'scoped memory for tpu_custom_call.1']
    #allocation5 [shape = 's32[2]{0}', space=sflag, size = 0x8, scoped, tag = 'scoped memory for tpu_custom_call.1']
    #allocation6 [shape = 'u8[8192]{0}', space=vmem, size = 0x2000, scoped, tag = 'input window, operand 1']
    #allocation7 [shape = 's32[2]{0}', space=sflag, size = 0x8, scoped, tag = 'scoped memory for tpu_custom_call.1']
    #allocation8 [shape = 'u8[8192]{0}', space=vmem, size = 0x2000, scoped, tag = 'input window, operand 2']
    #allocation9 [shape = 'u8[8192]{0}', space=vmem, size = 0x2000, scoped, tag = 'input window, operand 3, single buffered']
    #allocation10 [shape = 's32[1]{0}', space=sflag, size = 0x4, scoped, tag = 'scoped memory for tpu_custom_call.1']
    #allocation11 [shape = 'u8[65536]{0}', space=vmem, size = 0x10000, scoped, tag = 'input window, operand 6, single buffered']
    #allocation12 [shape = 'u8[512]{0}', space=smem, size = 0x200, scoped, tag = 'input window, operand 7, single buffered']
    #allocation13 [shape = 'u8[4096]{0}', space=vmem, size = 0x1000, scoped, tag = 'output window, operand 0']
    #allocation14 [shape = 'u8[16384]{0}', space=vmem, size = 0x4000, scoped, tag = 'output window, operand 1']
    #allocation15 [shape = 's32[2]{0}', space=sflag, size = 0x8, scoped, tag = 'scoped memory for tpu_custom_call.1']
    #allocation16 [shape = 'u8[16384]{0}', space=vmem, size = 0x4000, scoped, tag = 'output window, operand 2']
    %16 = vsyncpa [#allocation3], 0
    %s17 = scalar_lea.sflag [#allocation3], 1
    %18 = vsyncpa %s17, 0
    %19 = vsyncpa [#allocation7], 0
    %s20 = scalar_lea.sflag [#allocation7], 1
    %21 = vsyncpa %s20, 0
    %22 = vsyncpa [#allocation10], 0
    %23 = vsyncpa [#allocation5], 0
    %24 = vsyncpa [#allocation4], 0
    %s25 = scalar_lea.sflag [#allocation4], 1
    %26 = vsyncpa %s25, 0
    %27 = vsyncpa [#allocation15], 0
    %s28 = scalar_lea.sflag [#allocation15], 1
    %29 = vsyncpa %s28, 0
    loop: start=0, step=1, limit=4
    $region2: #{tpu_custom_call.1} parent=1 // loop_pre_header
      _
    $region3: #{tpu_custom_call.1} parent=1 // loop_header
      %s31 = sphi 0, %s35
      %p32 = scmp.ge.s32.totalorder %s31, 4
      %s41 = sphi 0, %s43
      %s44 = sphi 0, %s41
      %s45 = sphi 0, %s44
      %s61 = sphi 0, %s45
      %s67 = sphi 0, %s69
      %s70 = sphi 0, %s67
      %s71 = sphi 0, %s70
      %s87 = sphi 0, %s71
      %s93 = sphi 0, %s95
      %s96 = sphi 0, %s93
      %s97 = sphi 0, %s96
      %s113 = sphi 0, %s97
      %s117 = sphi 0, %s117
      %s119 = sphi 0, %s117
      %s120 = sphi 0, %s119
      %s134 = sphi 0, %s120
      %s138 = sphi 0, %s138
      %s140 = sphi 0, %s138
      %s141 = sphi 0, %s140
      %s155 = sphi 0, %s141
      %s159 = sphi 0, %s159
      %s161 = sphi 0, %s159
      %s162 = sphi 0, %s161
      %s176 = sphi 0, %s162
      %s180 = sphi 0, %s180
      %s182 = sphi 0, %s180
      %s183 = sphi 0, %s182
      %s197 = sphi 0, %s183
      %s201 = sphi 0, %s201
      %s203 = sphi 0, %s201
      %s204 = sphi 0, %s203
      %s218 = sphi 0, %s204
      %s224 = sphi 0, %s226
      %s227 = sphi 0, %s224
      %s228 = sphi 0, %s227
      %s244 = sphi 0, %s228
      %s250 = sphi 0, %s252
      %s253 = sphi 0, %s250
      %s254 = sphi 0, %s253
      %s270 = sphi 0, %s254
      %s276 = sphi 0, %s278
      %s279 = sphi 0, %s276
      %s280 = sphi 0, %s279
      %s296 = sphi 0, %s280
    $region4: #{tpu_custom_call.1} parent=1 // loop_header_branch
      %34 = sbr.rel (%p32) target = $region8
    $region5: #{tpu_custom_call.1} parent=1 // loop_body
      %s36 = ssub.s32 %s31, 1
      %s37 = ssub.s32 %s31, 2
      %s38 = sadd.s32 %s31, 1
      %s39 = ssub.s32 %s31, %s38
      %p40 = scmp.eq.s32.totalorder %s39, 0
      %s42 = sadd.s32 %s41, 1
      %s43 = scalar_select %p40, %s41, %s42
      %p46 = pneg %p40
      %p47 = scmp.eq.s32.totalorder %s31, 1
      %p48 = por %p46, %p47
      %p49 = scmp.ne.s32.totalorder %s41, %s44
      %p50 = scmp.eq.s32.totalorder %s31, 0
      %p51 = por %p49, %p50
      %p52 = scmp.ne.s32.totalorder %s41, %s44
      %p53 = scmp.eq.s32.totalorder %s36, 1
      %p54 = por %p52, %p53
      %p55 = scmp.ne.s32.totalorder %s44, %s45
      %p56 = scmp.eq.s32.totalorder %s36, 0
      %p57 = por %p55, %p56
      %p58 = scmp.ne.s32.totalorder %s44, %s45
      %p59 = scmp.eq.s32.totalorder %s37, 1
      %p60 = por %p58, %p59
      %p62 = scmp.ne.s32.totalorder %s45, %s61
      %p63 = scmp.eq.s32.totalorder %s37, 0
      %p64 = por %p62, %p63
      %s65 = ssub.s32 %s31, %s38
      %p66 = scmp.eq.s32.totalorder %s65, 0
      %s68 = sadd.s32 %s67, 1
      %s69 = scalar_select %p66, %s67, %s68
      %p72 = pneg %p66
      %p73 = scmp.eq.s32.totalorder %s31, 1
      %p74 = por %p72, %p73
      %p75 = scmp.ne.s32.totalorder %s67, %s70
      %p76 = scmp.eq.s32.totalorder %s31, 0
      %p77 = por %p75, %p76
      %p78 = scmp.ne.s32.totalorder %s67, %s70
      %p79 = scmp.eq.s32.totalorder %s36, 1
      %p80 = por %p78, %p79
      %p81 = scmp.ne.s32.totalorder %s70, %s71
      %p82 = scmp.eq.s32.totalorder %s36, 0
      %p83 = por %p81, %p82
      %p84 = scmp.ne.s32.totalorder %s70, %s71
      %p85 = scmp.eq.s32.totalorder %s37, 1
      %p86 = por %p84, %p85
      %p88 = scmp.ne.s32.totalorder %s71, %s87
      %p89 = scmp.eq.s32.totalorder %s37, 0
      %p90 = por %p88, %p89
      %s91 = ssub.s32 %s31, %s38
      %p92 = scmp.eq.s32.totalorder %s91, 0
      %s94 = sadd.s32 %s93, 1
      %s95 = scalar_select %p92, %s93, %s94
      %p98 = pneg %p92
      %p99 = scmp.eq.s32.totalorder %s31, 1
      %p100 = por %p98, %p99
      %p101 = scmp.ne.s32.totalorder %s93, %s96
      %p102 = scmp.eq.s32.totalorder %s31, 0
      %p103 = por %p101, %p102
      %p104 = scmp.ne.s32.totalorder %s93, %s96
      %p105 = scmp.eq.s32.totalorder %s36, 1
      %p106 = por %p104, %p105
      %p107 = scmp.ne.s32.totalorder %s96, %s97
      %p108 = scmp.eq.s32.totalorder %s36, 0
      %p109 = por %p107, %p108
      %p110 = scmp.ne.s32.totalorder %s96, %s97
      %p111 = scmp.eq.s32.totalorder %s37, 1
      %p112 = por %p110, %p111
      %p114 = scmp.ne.s32.totalorder %s97, %s113
      %p115 = scmp.eq.s32.totalorder %s37, 0
      %p116 = por %p114, %p115
      %s118 = sadd.s32 %s117, 1
      %p121 = scmp.eq.s32.totalorder %s31, 1
      %p122 = scmp.ne.s32.totalorder %s117, %s119
      %p123 = scmp.eq.s32.totalorder %s31, 0
      %p124 = por %p122, %p123
      %p125 = scmp.ne.s32.totalorder %s117, %s119
      %p126 = scmp.eq.s32.totalorder %s36, 1
      %p127 = por %p125, %p126
      %p128 = scmp.ne.s32.totalorder %s119, %s120
      %p129 = scmp.eq.s32.totalorder %s36, 0
      %p130 = por %p128, %p129
      %p131 = scmp.ne.s32.totalorder %s119, %s120
      %p132 = scmp.eq.s32.totalorder %s37, 1
      %p133 = por %p131, %p132
      %p135 = scmp.ne.s32.totalorder %s120, %s134
      %p136 = scmp.eq.s32.totalorder %s37, 0
      %p137 = por %p135, %p136
      %s139 = sadd.s32 %s138, 1
      %p142 = scmp.eq.s32.totalorder %s31, 1
      %p143 = scmp.ne.s32.totalorder %s138, %s140
      %p144 = scmp.eq.s32.totalorder %s31, 0
      %p145 = por %p143, %p144
      %p146 = scmp.ne.s32.totalorder %s138, %s140
      %p147 = scmp.eq.s32.totalorder %s36, 1
      %p148 = por %p146, %p147
      %p149 = scmp.ne.s32.totalorder %s140, %s141
      %p150 = scmp.eq.s32.totalorder %s36, 0
      %p151 = por %p149, %p150
      %p152 = scmp.ne.s32.totalorder %s140, %s141
      %p153 = scmp.eq.s32.totalorder %s37, 1
      %p154 = por %p152, %p153
      %p156 = scmp.ne.s32.totalorder %s141, %s155
      %p157 = scmp.eq.s32.totalorder %s37, 0
      %p158 = por %p156, %p157
      %s160 = sadd.s32 %s159, 1
      %p163 = scmp.eq.s32.totalorder %s31, 1
      %p164 = scmp.ne.s32.totalorder %s159, %s161
      %p165 = scmp.eq.s32.totalorder %s31, 0
      %p166 = por %p164, %p165
      %p167 = scmp.ne.s32.totalorder %s159, %s161
      %p168 = scmp.eq.s32.totalorder %s36, 1
      %p169 = por %p167, %p168
      %p170 = scmp.ne.s32.totalorder %s161, %s162
      %p171 = scmp.eq.s32.totalorder %s36, 0
      %p172 = por %p170, %p171
      %p173 = scmp.ne.s32.totalorder %s161, %s162
      %p174 = scmp.eq.s32.totalorder %s37, 1
      %p175 = por %p173, %p174
      %p177 = scmp.ne.s32.totalorder %s162, %s176
      %p178 = scmp.eq.s32.totalorder %s37, 0
      %p179 = por %p177, %p178
      %s181 = sadd.s32 %s180, 1
      %p184 = scmp.eq.s32.totalorder %s31, 1
      %p185 = scmp.ne.s32.totalorder %s180, %s182
      %p186 = scmp.eq.s32.totalorder %s31, 0
      %p187 = por %p185, %p186
      %p188 = scmp.ne.s32.totalorder %s180, %s182
      %p189 = scmp.eq.s32.totalorder %s36, 1
      %p190 = por %p188, %p189
      %p191 = scmp.ne.s32.totalorder %s182, %s183
      %p192 = scmp.eq.s32.totalorder %s36, 0
      %p193 = por %p191, %p192
      %p194 = scmp.ne.s32.totalorder %s182, %s183
      %p195 = scmp.eq.s32.totalorder %s37, 1
      %p196 = por %p194, %p195
      %p198 = scmp.ne.s32.totalorder %s183, %s197
      %p199 = scmp.eq.s32.totalorder %s37, 0
      %p200 = por %p198, %p199
      %s202 = sadd.s32 %s201, 1
      %p205 = scmp.eq.s32.totalorder %s31, 1
      %p206 = scmp.ne.s32.totalorder %s201, %s203
      %p207 = scmp.eq.s32.totalorder %s31, 0
      %p208 = por %p206, %p207
      %p209 = scmp.ne.s32.totalorder %s201, %s203
      %p210 = scmp.eq.s32.totalorder %s36, 1
      %p211 = por %p209, %p210
      %p212 = scmp.ne.s32.totalorder %s203, %s204
      %p213 = scmp.eq.s32.totalorder %s36, 0
      %p214 = por %p212, %p213
      %p215 = scmp.ne.s32.totalorder %s203, %s204
      %p216 = scmp.eq.s32.totalorder %s37, 1
      %p217 = por %p215, %p216
      %p219 = scmp.ne.s32.totalorder %s204, %s218
      %p220 = scmp.eq.s32.totalorder %s37, 0
      %p221 = por %p219, %p220
      %s222 = ssub.s32 %s31, %s38
      %p223 = scmp.eq.s32.totalorder %s222, 0
      %s225 = sadd.s32 %s224, 1
      %s226 = scalar_select %p223, %s224, %s225
      %p229 = pneg %p223
      %p230 = scmp.eq.s32.totalorder %s31, 1
      %p231 = por %p229, %p230
      %p232 = scmp.ne.s32.totalorder %s224, %s227
      %p233 = scmp.eq.s32.totalorder %s31, 0
      %p234 = por %p232, %p233
      %p235 = scmp.ne.s32.totalorder %s224, %s227
      %p236 = scmp.eq.s32.totalorder %s36, 1
      %p237 = por %p235, %p236
      %p238 = scmp.ne.s32.totalorder %s227, %s228
      %p239 = scmp.eq.s32.totalorder %s36, 0
      %p240 = por %p238, %p239
      %p241 = scmp.ne.s32.totalorder %s227, %s228
      %p242 = scmp.eq.s32.totalorder %s37, 1
      %p243 = por %p241, %p242
      %p245 = scmp.ne.s32.totalorder %s228, %s244
      %p246 = scmp.eq.s32.totalorder %s37, 0
      %p247 = por %p245, %p246
      %s248 = ssub.s32 %s31, %s38
      %p249 = scmp.eq.s32.totalorder %s248, 0
      %s251 = sadd.s32 %s250, 1
      %s252 = scalar_select %p249, %s250, %s251
      %p255 = pneg %p249
      %p256 = scmp.eq.s32.totalorder %s31, 1
      %p257 = por %p255, %p256
      %p258 = scmp.ne.s32.totalorder %s250, %s253
      %p259 = scmp.eq.s32.totalorder %s31, 0
      %p260 = por %p258, %p259
      %p261 = scmp.ne.s32.totalorder %s250, %s253
      %p262 = scmp.eq.s32.totalorder %s36, 1
      %p263 = por %p261, %p262
      %p264 = scmp.ne.s32.totalorder %s253, %s254
      %p265 = scmp.eq.s32.totalorder %s36, 0
      %p266 = por %p264, %p265
      %p267 = scmp.ne.s32.totalorder %s253, %s254
      %p268 = scmp.eq.s32.totalorder %s37, 1
      %p269 = por %p267, %p268
      %p271 = scmp.ne.s32.totalorder %s254, %s270
      %p272 = scmp.eq.s32.totalorder %s37, 0
      %p273 = por %p271, %p272
      %s274 = ssub.s32 %s31, %s38
      %p275 = scmp.eq.s32.totalorder %s274, 0
      %s277 = sadd.s32 %s276, 1
      %s278 = scalar_select %p275, %s276, %s277
      %p281 = pneg %p275
      %p282 = scmp.eq.s32.totalorder %s31, 1
      %p283 = por %p281, %p282
      %p284 = scmp.ne.s32.totalorder %s276, %s279
      %p285 = scmp.eq.s32.totalorder %s31, 0
      %p286 = por %p284, %p285
      %p287 = scmp.ne.s32.totalorder %s276, %s279
      %p288 = scmp.eq.s32.totalorder %s36, 1
      %p289 = por %p287, %p288
      %p290 = scmp.ne.s32.totalorder %s279, %s280
      %p291 = scmp.eq.s32.totalorder %s36, 0
      %p292 = por %p290, %p291
      %p293 = scmp.ne.s32.totalorder %s279, %s280
      %p294 = scmp.eq.s32.totalorder %s37, 1
      %p295 = por %p293, %p294
      %p297 = scmp.ne.s32.totalorder %s280, %s296
      %p298 = scmp.eq.s32.totalorder %s37, 0
      %p299 = por %p297, %p298
      %p300 = scmp.le.s32.totalorder 1, %s31
      %p301 = scmp.lt.s32.totalorder %s31, 3
      %p302 = pnand %p300, %p301
      %p303 = pneg %p302
      // Predicated region
      $region9: #{tpu_custom_call.1} parent=5 // pred_check
        _
      $region10: #{tpu_custom_call.1} parent=5 // pred_check_branch
        %305 = sbr.rel (%p302) target = $region12
      $region11: #{tpu_custom_call.1} parent=5 // pred_region
        %s306 = ssub.s32 %s31, 1
        // Predicated region
        $region13: #{tpu_custom_call.1} parent=11 // pred_check
          %p307 = pneg %p130
        $region14: #{tpu_custom_call.1} parent=11 // pred_check_branch
          %309 = sbr.rel (%p307) target = $region16
        $region15: #{tpu_custom_call.1} parent=11 // pred_region
          %s311 = ssub.s32 256, 256
          %312 = vsyncadd [#allocation10], %s311
          %s313 = sshll.u32 [#allocation9], 4
          %s314 = int_to_ptr.vmem [resolvable:$true] %s313
          %319 = dma.hbm_to_vmem [thread:$0]  %s3, 256, %s314, [#allocation10], 128, 128, 8
        $region16: #{tpu_custom_call.1} parent=11 // pred_fallthru
          _
        // Predicated region
        $region17: #{tpu_custom_call.1} parent=11 // pred_check
          %p320 = pneg %p151
        $region18: #{tpu_custom_call.1} parent=11 // pred_check_branch
          %322 = sbr.rel (%p320) target = $region20
        $region19: #{tpu_custom_call.1} parent=11 // pred_region
          _
        $region20: #{tpu_custom_call.1} parent=11 // pred_fallthru
          _
        // Predicated region
        $region21: #{tpu_custom_call.1} parent=11 // pred_check
          %p323 = pneg %p172
        $region22: #{tpu_custom_call.1} parent=11 // pred_check_branch
          %325 = sbr.rel (%p323) target = $region24
        $region23: #{tpu_custom_call.1} parent=11 // pred_region
          _
        $region24: #{tpu_custom_call.1} parent=11 // pred_fallthru
          _
        // Predicated region
        $region25: #{tpu_custom_call.1} parent=11 // pred_check
          %p326 = pneg %p193
        $region26: #{tpu_custom_call.1} parent=11 // pred_check_branch
          %328 = sbr.rel (%p326) target = $region28
        $region27: #{tpu_custom_call.1} parent=11 // pred_region
          %s330 = ssub.s32 2048, 2048
          %331 = vsyncadd [#allocation10], %s330
          %s332 = sshll.u32 [#allocation11], 4
          %s333 = int_to_ptr.vmem [resolvable:$true] %s332
          %338 = dma.hbm_to_vmem [thread:$0]  %s6, 2048, %s333, [#allocation10], 128, 128, 8
        $region28: #{tpu_custom_call.1} parent=11 // pred_fallthru
          _
        // Predicated region
        $region29: #{tpu_custom_call.1} parent=11 // pred_check
          %p339 = pneg %p214
        $region30: #{tpu_custom_call.1} parent=11 // pred_check_branch
          %341 = sbr.rel (%p339) target = $region32
        $region31: #{tpu_custom_call.1} parent=11 // pred_region
          %s343 = ssub.s32 16, 16
          %344 = vsyncadd [#allocation5], %s343
          %s346 = sshll.u32 %s7, 4
          %s347 = int_to_ptr.vmem [resolvable:$true] %s346
          %349 = dma.vmem_to_smem %s347, 16, [#allocation12], [#allocation5]
        $region32: #{tpu_custom_call.1} parent=11 // pred_fallthru
          _
      $region12: #{tpu_custom_call.1} parent=5 // pred_fallthru
        _
      %p350 = scmp.lt.s32.totalorder %s31, 2
      // Predicated region
      $region33: #{tpu_custom_call.1} parent=5 // pred_check
        %p351 = pneg %p350
      $region34: #{tpu_custom_call.1} parent=5 // pred_check_branch
        %353 = sbr.rel (%p351) target = $region36
      $region35: #{tpu_custom_call.1} parent=5 // pred_region
        // Predicated region
        $region37: #{tpu_custom_call.1} parent=35 // pred_check
          %p354 = pneg %p51
        $region38: #{tpu_custom_call.1} parent=35 // pred_check_branch
          %356 = sbr.rel (%p354) target = $region40
        $region39: #{tpu_custom_call.1} parent=35 // pred_region
          #allocation18 [shape = 'u32[6]{0}', space=smem, size = 0x18, scoped, tag = 'DMA stride descriptor']
          %s357 = sand.u32 %s41, 1
          %s358 = scalar_lea.sflag [#allocation3], %s357
          %s359 = sand.u32 %s41, 1
          %s360 = smul.addr %s359, 16
          %s361 = scalar_lea.vmem [#allocation2], %s360
          %s363 = ssub.s32 256, 256
          %364 = vsyncadd %s358, %s363
          %s365 = smul.addr %s31, 2
          %s366 = smul.addr %s365, 64
          %s367 = scalar_lea.hbm %s0, %s366
          %s369 = sshll.u32 1, 14
          %s370 = sxor.u32 4294967295, %s369
          %s372 = sld [smem:[#allocation0]]
          %s373 = sadd.s32 2, %s372
          %s375 = sshll.u32 7, 26
          %s376 = sxor.u32 4294967295, %s375
          %s377 = sand.u32 0, %s376
          %s378 = sshll.u32 %s373, 26
          %s379 = sor.u32 %s377, %s378
          %s380 = sshll.u32 %s361, 4
          %s381 = int_to_ptr.vmem [resolvable:$true] %s380
          %387 = sst [smem:[#allocation18]] 256
          %s388 = scalar_lea.smem [#allocation18], 1
          %389 = sst [smem:[%s388]] 128
          %s390 = scalar_lea.smem [#allocation18], 2
          %391 = sst [smem:[%s390]] 2
          %s392 = scalar_lea.smem [#allocation18], 3
          %393 = sst [smem:[%s392]] 64
          %s394 = scalar_lea.smem [#allocation18], 4
          %395 = sst [smem:[%s394]] 64
          %s396 = scalar_lea.smem [#allocation18], 5
          %397 = sst [smem:[%s396]] 4
          %399 = dma.general %s367, 256, %s381, %s358, [#allocation17], [#allocation18], %s379, 0
        $region40: #{tpu_custom_call.1} parent=35 // pred_fallthru
          _
        // Predicated region
        $region41: #{tpu_custom_call.1} parent=35 // pred_check
          %p400 = pneg %p77
        $region42: #{tpu_custom_call.1} parent=35 // pred_check_branch
          %402 = sbr.rel (%p400) target = $region44
        $region43: #{tpu_custom_call.1} parent=35 // pred_region
          %s403 = sand.u32 %s31, 1
          %s404 = scalar_lea.sflag [#allocation7], %s403
          %s405 = sand.u32 %s67, 1
          %s406 = smul.addr %s405, 8
          %s407 = scalar_lea.vmem [#allocation6], %s406
          %s409 = ssub.s32 128, 128
          %410 = vsyncadd %s404, %s409
          %s411 = smul.addr %s31, 2
          %s412 = smul.addr %s411, 64
          %s413 = scalar_lea.hbm %s1, %s412
          %s414 = sshll.u32 %s407, 4
          %s415 = int_to_ptr.vmem [resolvable:$true] %s414
          %420 = dma.hbm_to_vmem [thread:$0]  %s413, 128, %s415, %s404, 64, 64, 4
        $region44: #{tpu_custom_call.1} parent=35 // pred_fallthru
          _
        // Predicated region
        $region45: #{tpu_custom_call.1} parent=35 // pred_check
          %p421 = pneg %p103
        $region46: #{tpu_custom_call.1} parent=35 // pred_check_branch
          %423 = sbr.rel (%p421) target = $region48
        $region47: #{tpu_custom_call.1} parent=35 // pred_region
          %s424 = sand.u32 %s31, 1
          %s425 = scalar_lea.sflag [#allocation7], %s424
          %s426 = sand.u32 %s93, 1
          %s427 = smul.addr %s426, 8
          %s428 = scalar_lea.vmem [#allocation8], %s427
          %s430 = ssub.s32 128, 128
          %431 = vsyncadd %s425, %s430
          %s432 = smul.addr %s31, 2
          %s433 = smul.addr %s432, 64
          %s434 = scalar_lea.hbm %s2, %s433
          %s435 = sshll.u32 %s428, 4
          %s436 = int_to_ptr.vmem [resolvable:$true] %s435
          %441 = dma.hbm_to_vmem [thread:$0]  %s434, 128, %s436, %s425, 64, 64, 4
        $region48: #{tpu_custom_call.1} parent=35 // pred_fallthru
          _
      $region36: #{tpu_custom_call.1} parent=5 // pred_fallthru
        _
      %p442 = scmp.le.s32.totalorder 1, %s31
      %p443 = scmp.lt.s32.totalorder %s31, 3
      %p444 = pnand %p442, %p443
      %p445 = pneg %p444
      // Predicated region
      $region49: #{tpu_custom_call.1} parent=5 // pred_check
        _
      $region50: #{tpu_custom_call.1} parent=5 // pred_check_branch
        %447 = sbr.rel (%p444) target = $region52
      $region51: #{tpu_custom_call.1} parent=5 // pred_region
        %s448 = ssub.s32 %s31, 1
        %s449 = sand.u32 %s44, 1
        %s450 = scalar_lea.sflag [#allocation3], %s449
        %s451 = sand.u32 %s44, 1
        %s452 = smul.addr %s451, 16
        %s453 = scalar_lea.vmem [#allocation2], %s452
        // Predicated region
        $region53: #{tpu_custom_call.1} parent=51 // pred_check
          %p454 = pneg %p57
        $region54: #{tpu_custom_call.1} parent=51 // pred_check_branch
          %456 = sbr.rel (%p454) target = $region56
        $region55: #{tpu_custom_call.1} parent=51 // pred_region
          %457 = dma.done %s450, 256
        $region56: #{tpu_custom_call.1} parent=51 // pred_fallthru
          _
        %s458 = sand.u32 %s36, 1
        %s459 = scalar_lea.sflag [#allocation7], %s458
        %s460 = sand.u32 %s70, 1
        %s461 = smul.addr %s460, 8
        %s462 = scalar_lea.vmem [#allocation6], %s461
        // Predicated region
        $region57: #{tpu_custom_call.1} parent=51 // pred_check
          %p463 = pneg %p83
        $region58: #{tpu_custom_call.1} parent=51 // pred_check_branch
          %465 = sbr.rel (%p463) target = $region60
        $region59: #{tpu_custom_call.1} parent=51 // pred_region
          %466 = dma.done %s459, 128
        $region60: #{tpu_custom_call.1} parent=51 // pred_fallthru
          _
        %s467 = sand.u32 %s36, 1
        %s468 = scalar_lea.sflag [#allocation7], %s467
        %s469 = sand.u32 %s96, 1
        %s470 = smul.addr %s469, 8
        %s471 = scalar_lea.vmem [#allocation8], %s470
        // Predicated region
        $region61: #{tpu_custom_call.1} parent=51 // pred_check
          %p472 = pneg %p109
        $region62: #{tpu_custom_call.1} parent=51 // pred_check_branch
          %474 = sbr.rel (%p472) target = $region64
        $region63: #{tpu_custom_call.1} parent=51 // pred_region
          %475 = dma.done %s468, 128
        $region64: #{tpu_custom_call.1} parent=51 // pred_fallthru
          _
        // Predicated region
        $region65: #{tpu_custom_call.1} parent=51 // pred_check
          %p476 = pneg %p130
        $region66: #{tpu_custom_call.1} parent=51 // pred_check_branch
          %478 = sbr.rel (%p476) target = $region68
        $region67: #{tpu_custom_call.1} parent=51 // pred_region
          %479 = dma.done [#allocation10], 256
        $region68: #{tpu_custom_call.1} parent=51 // pred_fallthru
          _
        // Predicated region
        $region69: #{tpu_custom_call.1} parent=51 // pred_check
          %p480 = pneg %p193
        $region70: #{tpu_custom_call.1} parent=51 // pred_check_branch
          %482 = sbr.rel (%p480) target = $region72
        $region71: #{tpu_custom_call.1} parent=51 // pred_region
          %483 = dma.done [#allocation10], 2048
        $region72: #{tpu_custom_call.1} parent=51 // pred_fallthru
          _
        // Predicated region
        $region73: #{tpu_custom_call.1} parent=51 // pred_check
          %p484 = pneg %p214
        $region74: #{tpu_custom_call.1} parent=51 // pred_check_branch
          %486 = sbr.rel (%p484) target = $region76
        $region75: #{tpu_custom_call.1} parent=51 // pred_region
          %487 = dma.done [#allocation5], 16
        $region76: #{tpu_custom_call.1} parent=51 // pred_fallthru
          _
        %488 = sfence
        %s489 = sand.u32 %s44, 1
        %s490 = scalar_lea.sflag [#allocation3], %s489
        %s491 = sand.u32 %s44, 1
        %s492 = smul.addr %s491, 16
        %s493 = scalar_lea.vmem [#allocation2], %s492
        %p494 = pneg %p57
        %p495 = pneg %p54
        %s496 = sand.u32 %s36, 1
        %s497 = scalar_lea.sflag [#allocation7], %s496
        %s498 = sand.u32 %s70, 1
        %s499 = smul.addr %s498, 8
        %s500 = scalar_lea.vmem [#allocation6], %s499
        %p501 = pneg %p83
        %p502 = pneg %p80
        %s503 = sand.u32 %s36, 1
        %s504 = scalar_lea.sflag [#allocation7], %s503
        %s505 = sand.u32 %s96, 1
        %s506 = smul.addr %s505, 8
        %s507 = scalar_lea.vmem [#allocation8], %s506
        %p508 = pneg %p109
        %p509 = pneg %p106
        %p510 = pneg %p130
        %p511 = pneg %p127
        %p512 = pneg %p151
        %p513 = pneg %p148
        %p514 = pneg %p172
        %p515 = pneg %p169
        %p516 = pneg %p193
        %p517 = pneg %p190
        %p518 = pneg %p214
        %p519 = pneg %p211
        %p520 = pneg %p240
        %p521 = pneg %p237
        %s522 = sand.u32 %s227, 1
        %s523 = scalar_lea.sflag [#allocation4], %s522
        %s524 = sand.u32 %s227, 1
        %s525 = smul.addr %s524, 4
        %s526 = scalar_lea.vmem [#allocation13], %s525
        %p527 = pneg %p266
        %p528 = pneg %p263
        %s529 = sand.u32 %s36, 1
        %s530 = scalar_lea.sflag [#allocation15], %s529
        %s531 = sand.u32 %s253, 1
        %s532 = smul.addr %s531, 16
        %s533 = scalar_lea.vmem [#allocation14], %s532
        %p534 = pneg %p292
        %p535 = pneg %p289
        %s536 = sand.u32 %s36, 1
        %s537 = scalar_lea.sflag [#allocation15], %s536
        %s538 = sand.u32 %s279, 1
        %s539 = smul.addr %s538, 16
        %s540 = scalar_lea.vmem [#allocation16], %s539
        %s542 = sld [smem:[#allocation12]]
        %s543 = sld [smem:[#allocation12 + $0x1]]
        %s544 = sld [smem:[#allocation12 + $0x2]]
        %s545 = sld [smem:[#allocation12 + $0x3]]
        %v546 = vld [vmem:[%s453] sm:$0xf]
        %v547 = vld [vmem:[%s453 + $0x4] sm:$0xf]
        %v548 = vld [vmem:[%s453 + $0x8] sm:$0xf]
        %v549 = vld [vmem:[%s453 + $0xc] sm:$0xf]
        %v550 = vld [vmem:[#allocation9] sm:$0xff]
        %v551 = vld [vmem:[#allocation9 + $0x8] sm:$0xff]
        %v556 = vunpack.c.l.b16 %v546
        %v557 = vunpack.c.l.b16 %v547
        %v558 = vunpack.c.l.b16 %v548
        %v559 = vunpack.c.l.b16 %v549
        %v560 = vpack.c.b16 %v557, %v556
        %v561 = vpack.c.b16 %v559, %v558
        %v564 = vunpack.c.l.b16 %v550
        %v565 = vunpack.c.h.b16 %v550
        %v566 = vunpack.c.l.b16 %v551
        %v567 = vunpack.c.h.b16 %v551
        %v568 = vpack.c.b16 %v566, %v564
        %v569 = vpack.c.b16 %v567, %v565
        %vm572 = vcmask 130048
        %v574 = vsel %vm572, %v560, 0
        %v577 = vsel %vm572, %v561, 0
        %579 = vmatprep.subr.bf16.mxu0 %v569
        %580 = vmatpush1.bf16.msra.mxu0 %v568
        %581 = vmatprep.subr.bf16.mxu0 0
        %582 = vmatpush1.bf16.msra.mxu0 0
        %583 = vmatprep.subr.bf16.mxu0 0
        %584 = vmatpush1.bf16.msra.mxu0 0
        %585 = vmatprep.subr.bf16.mxu0 0
        %586 = vmatpush1.bf16.msra.mxu0 0
        %587 = vmatprep.subr.bf16.mxu0 0
        %588 = vmatpush1.bf16.msra.mxu0 0
        %589 = vmatprep.subr.bf16.mxu0 0
        %590 = vmatpush1.bf16.msra.mxu0 0
        %591 = vmatprep.subr.bf16.mxu0 0
        %592 = vmatpush1.bf16.msra.mxu0 0
        %593 = vmatprep.subr.bf16.mxu0 0
        %594 = vmatpush1.bf16.msra.mxu0 0
        %595 = vmatprep.subr.bf16.mxu0 0
        %596 = vmatpush1.bf16.msra.mxu0 0
        %597 = vmatprep.subr.bf16.mxu0 0
        %598 = vmatpush1.bf16.msra.mxu0 0
        %599 = vmatprep.subr.bf16.mxu0 0
        %600 = vmatpush1.bf16.msra.mxu0 0
        %601 = vmatprep.subr.bf16.mxu0 0
        %602 = vmatpush1.bf16.msra.mxu0 0
        %603 = vmatprep.subr.bf16.mxu0 0
        %604 = vmatpush1.bf16.msra.mxu0 0
        %605 = vmatprep.subr.bf16.mxu0 0
        %606 = vmatpush1.bf16.msra.mxu0 0
        %607 = vmatprep.subr.bf16.mxu0 0
        %608 = vmatpush1.bf16.msra.mxu0 0
        %609 = vmatprep.subr.bf16.mxu0 0
        %610 = vmatpush1.bf16.msra.mxu0 0
        %611 = vmatprep.mubr.bf16.mxu0 0
        %612 = vmatmul.mubr.bf16.gmra.mrb[0].mxu0 %v574
        %v613 = vpop.f32.mrb[0].mxu0
        %v614 = vadd.f32 0.0, %v613
        %v615 = vpop.f32.mrb[0].mxu0
        %v616 = vadd.f32 0.0, %v615
        %v617 = vpop.f32.mrb[0].mxu0
        %v618 = vadd.f32 0.0, %v617
        %v619 = vpop.f32.mrb[0].mxu0
        %v620 = vadd.f32 0.0, %v619
        %621 = vmatprep.mubr.bf16.mxu0 0
        %622 = vmatmul.mubr.bf16.gmra.mrb[0].mxu0 %v577
        %v623 = vpop.f32.mrb[0].mxu0
        %v624 = vadd.f32 0.0, %v623
        %v625 = vpop.f32.mrb[0].mxu0
        %v626 = vadd.f32 0.0, %v625
        %v627 = vpop.f32.mrb[0].mxu0
        %v628 = vadd.f32 0.0, %v627
        %v629 = vpop.f32.mrb[0].mxu0
        %v630 = vadd.f32 0.0, %v629
        %631 = vdwg.mxu0
        %v632 = vpack.c.bf16 %v618, %v614
        %v633 = vpack.c.bf16 %v620, %v616
        %v634 = vpack.c.bf16 %v628, %v624
        %v635 = vpack.c.bf16 %v630, %v626
        %v636 = vld [vmem:[%s462] sm:$0xf]
        %v637 = vld [vmem:[%s462 + $0x4] sm:$0xf]
        %v638 = vld [vmem:[%s4] sm:$0x3]
        %v640 = vlaneseq
        %v641 = vshrl.u32 %v640, 7
        %v642 = vsub.s32 0, %v641
        %v643 = vrot.slane %v638, %v642
        %v644 = vlaneseq
        %v645 = vshrl.u32 %v644, 7
        %v646 = vsub.s32 1, %v645
        %v647 = vrot.slane %v638, %v646
        %v652 = vunpack.c.l.b16 %v636
        %v653 = vunpack.c.l.b16 %v637
        %v654 = vpack.c.b16 %v653, %v652
        %v656 = vsel %vm572, %v654, 0
        %658 = vmatprep.subr.bf16.mxu0 %v634
        %659 = vmatpush1.bf16.msra.mxu0 %v632
        %660 = vmatprep.subr.bf16.mxu0 0
        %661 = vmatpush1.bf16.msra.mxu0 0
        %662 = vmatprep.subr.bf16.mxu0 0
        %663 = vmatpush1.bf16.msra.mxu0 0
        %664 = vmatprep.subr.bf16.mxu0 0
        %665 = vmatpush1.bf16.msra.mxu0 0
        %666 = vmatprep.subr.bf16.mxu0 0
        %667 = vmatpush1.bf16.msra.mxu0 0
        %668 = vmatprep.subr.bf16.mxu0 0
        %669 = vmatpush1.bf16.msra.mxu0 0
        %670 = vmatprep.subr.bf16.mxu0 0
        %671 = vmatpush1.bf16.msra.mxu0 0
        %672 = vmatprep.subr.bf16.mxu0 0
        %673 = vmatpush1.bf16.msra.mxu0 0
        %674 = vmatprep.subr.bf16.mxu0 0
        %675 = vmatpush1.bf16.msra.mxu0 0
        %676 = vmatprep.subr.bf16.mxu0 0
        %677 = vmatpush1.bf16.msra.mxu0 0
        %678 = vmatprep.subr.bf16.mxu0 0
        %679 = vmatpush1.bf16.msra.mxu0 0
        %680 = vmatprep.subr.bf16.mxu0 0
        %681 = vmatpush1.bf16.msra.mxu0 0
        %682 = vmatprep.subr.bf16.mxu0 0
        %683 = vmatpush1.bf16.msra.mxu0 0
        %684 = vmatprep.subr.bf16.mxu0 0
        %685 = vmatpush1.bf16.msra.mxu0 0
        %686 = vmatprep.subr.bf16.mxu0 0
        %687 = vmatpush1.bf16.msra.mxu0 0
        %688 = vmatprep.subr.bf16.mxu0 0
        %689 = vmatpush1.bf16.msra.mxu0 0
        %690 = vmatprep.mubr.bf16.mxu0 0
        %691 = vmatmul.mubr.bf16.gmra.mrb[0].mxu0 %v656
        %v692 = vpop.f32.mrb[0].mxu0
        %v693 = vadd.f32 %v643, %v692
        %v694 = vpop.f32.mrb[0].mxu0
        %v695 = vadd.f32 %v647, %v694
        %v696 = vpop.f32.mrb[0].mxu0
        %v697 = vadd.f32 %v643, %v696
        %v698 = vpop.f32.mrb[0].mxu0
        %v699 = vadd.f32 %v647, %v698
        %700 = vdwg.mxu0
        %vm701 = vcmp.gt.f32.partialorder %v693, 0.0
        %vm702 = vcmp.gt.f32.partialorder %v695, 0.0
        %vm703 = vcmp.gt.f32.partialorder %v697, 0.0
        %vm704 = vcmp.gt.f32.partialorder %v699, 0.0
        %v705 = vstv %s542
        %v706 = vmul.f32 %v705, %v693
        %v707 = vmul.f32 %v705, %v695
        %v708 = vmul.f32 %v705, %v697
        %v709 = vmul.f32 %v705, %v699
        %v710 = vsel %vm701, %v693, %v706
        %v711 = vsel %vm702, %v695, %v707
        %v712 = vsel %vm703, %v697, %v708
        %v713 = vsel %vm704, %v699, %v709
        %v714 = vld [vmem:[%s471] sm:$0xf]
        %v715 = vld [vmem:[%s471 + $0x4] sm:$0xf]
        %v716 = vld [vmem:[%s5] sm:$0x3]
        %v718 = vlaneseq
        %v719 = vshrl.u32 %v718, 7
        %v720 = vsub.s32 0, %v719
        %v721 = vrot.slane %v716, %v720
        %v722 = vlaneseq
        %v723 = vshrl.u32 %v722, 7
        %v724 = vsub.s32 1, %v723
        %v725 = vrot.slane %v716, %v724
        %v730 = vunpack.c.l.b16 %v714
        %v731 = vunpack.c.l.b16 %v715
        %v732 = vpack.c.b16 %v731, %v730
        %v734 = vsel %vm572, %v732, 0
        %736 = vmatprep.subr.bf16.mxu0 %v635
        %737 = vmatpush1.bf16.msra.mxu0 %v633
        %738 = vmatprep.subr.bf16.mxu0 0
        %739 = vmatpush1.bf16.msra.mxu0 0
        %740 = vmatprep.subr.bf16.mxu0 0
        %741 = vmatpush1.bf16.msra.mxu0 0
        %742 = vmatprep.subr.bf16.mxu0 0
        %743 = vmatpush1.bf16.msra.mxu0 0
        %744 = vmatprep.subr.bf16.mxu0 0
        %745 = vmatpush1.bf16.msra.mxu0 0
        %746 = vmatprep.subr.bf16.mxu0 0
        %747 = vmatpush1.bf16.msra.mxu0 0
        %748 = vmatprep.subr.bf16.mxu0 0
        %749 = vmatpush1.bf16.msra.mxu0 0
        %750 = vmatprep.subr.bf16.mxu0 0
        %751 = vmatpush1.bf16.msra.mxu0 0
        %752 = vmatprep.subr.bf16.mxu0 0
        %753 = vmatpush1.bf16.msra.mxu0 0
        %754 = vmatprep.subr.bf16.mxu0 0
        %755 = vmatpush1.bf16.msra.mxu0 0
        %756 = vmatprep.subr.bf16.mxu0 0
        %757 = vmatpush1.bf16.msra.mxu0 0
        %758 = vmatprep.subr.bf16.mxu0 0
        %759 = vmatpush1.bf16.msra.mxu0 0
        %760 = vmatprep.subr.bf16.mxu0 0
        %761 = vmatpush1.bf16.msra.mxu0 0
        %762 = vmatprep.subr.bf16.mxu0 0
        %763 = vmatpush1.bf16.msra.mxu0 0
        %764 = vmatprep.subr.bf16.mxu0 0
        %765 = vmatpush1.bf16.msra.mxu0 0
        %766 = vmatprep.subr.bf16.mxu0 0
        %767 = vmatpush1.bf16.msra.mxu0 0
        %768 = vmatprep.mubr.bf16.mxu0 0
        %769 = vmatmul.mubr.bf16.gmra.mrb[0].mxu0 %v734
        %v770 = vpop.f32.mrb[0].mxu0
        %v771 = vadd.f32 %v721, %v770
        %v772 = vpop.f32.mrb[0].mxu0
        %v773 = vadd.f32 %v725, %v772
        %v774 = vpop.f32.mrb[0].mxu0
        %v775 = vadd.f32 %v721, %v774
        %v776 = vpop.f32.mrb[0].mxu0
        %v777 = vadd.f32 %v725, %v776
        %778 = vdwg.mxu0
        %vm779 = vcmp.gt.f32.partialorder %v771, 0.0
        %vm780 = vcmp.gt.f32.partialorder %v773, 0.0
        %vm781 = vcmp.gt.f32.partialorder %v775, 0.0
        %vm782 = vcmp.gt.f32.partialorder %v777, 0.0
        %v783 = vstv %s543
        %v784 = vmul.f32 %v783, %v771
        %v785 = vmul.f32 %v783, %v773
        %v786 = vmul.f32 %v783, %v775
        %v787 = vmul.f32 %v783, %v777
        %v788 = vsel %vm779, %v771, %v784
        %v789 = vsel %vm780, %v773, %v785
        %v790 = vsel %vm781, %v775, %v786
        %v791 = vsel %vm782, %v777, %v787
        %792 = vst [vmem:[%s533] sm:$0xff] %v710
        %793 = vst [vmem:[%s533 + $0x8] sm:$0xff] %v712
        %794 = vst [vmem:[%s540] sm:$0xff] %v788
        %795 = vst [vmem:[%s540 + $0x8] sm:$0xff] %v790
        %v796 = vlaneseq
        %v797 = vshrl.u32 %v796, 7
        %v798 = vadd.s32 %v797, 8
        %v799 = vcvt.s32.f32 %v797
        %v800 = vcvt.s32.f32 %v798
        %v801 = vstv %s545
        %vm802 = vcmp.lt.f32.partialorder %v799, %v801
        %vm803 = vcmp.lt.f32.partialorder %v800, %v801
        %v804 = vsel %vm802, 1, 0
        %v805 = vsel %vm803, 1, 0
        %v806 = vcvt.s32.f32 %v804
        %v807 = vcvt.s32.f32 %v805
        %v808 = vmul.f32 %v710, %v806
        %v809 = vmul.f32 %v712, %v807
        %v810 = vadd.f32 %v808, %v809
        %v811 = vrot.slane %v810, 4
        %v812 = vadd.f32 %v810, %v811
        %v813 = vrot.slane %v812, 2
        %v814 = vadd.f32 %v812, %v813
        %v815 = vrot.slane %v814, 1
        %v816 = vadd.f32 %v814, %v815
        %v817 = vrcp.pop %v801
        %v818 = vmul.f32 %v816, %v817
        %v819 = vxor.u32 %v818, 2147483648
        %v820 = vmul.f32 %v819, 1.442695
        %v821 = vpow.pop %v820
        %v822 = vadd.f32 %v821, 1.0
        %v823 = vrcp.pop %v822
        %v824 = vmul.f32 1.0, %v823
        %v825 = vmul.f32 %v788, %v806
        %v826 = vmul.f32 %v790, %v807
        %v827 = vadd.f32 %v825, %v826
        %v828 = vrot.slane %v827, 4
        %v829 = vadd.f32 %v827, %v828
        %v830 = vrot.slane %v829, 2
        %v831 = vadd.f32 %v829, %v830
        %v832 = vrot.slane %v831, 1
        %v833 = vadd.f32 %v831, %v832
        %v834 = vmul.f32 %v833, %v817
        %v835 = vxor.u32 %v834, 2147483648
        %v836 = vmul.f32 %v835, 1.442695
        %v837 = vpow.pop %v836
        %v838 = vadd.f32 %v837, 1.0
        %v839 = vrcp.pop %v838
        %v840 = vmul.f32 1.0, %v839
        %v841 = vld [vmem:[#allocation11] sm:$0xff]
        %v842 = vld [vmem:[#allocation11 + $0x8] sm:$0xff]
        %v843 = vld [vmem:[#allocation11 + $0x10] sm:$0xff]
        %v844 = vld [vmem:[#allocation11 + $0x18] sm:$0xff]
        %v845 = vld [vmem:[#allocation11 + $0x20] sm:$0xff]
        %v846 = vld [vmem:[#allocation11 + $0x28] sm:$0xff]
        %v847 = vld [vmem:[#allocation11 + $0x30] sm:$0xff]
        %v848 = vld [vmem:[#allocation11 + $0x38] sm:$0xff]
        %v849 = vld [vmem:[#allocation11 + $0x40] sm:$0xff]
        %v850 = vld [vmem:[#allocation11 + $0x48] sm:$0xff]
        %v851 = vld [vmem:[#allocation11 + $0x50] sm:$0xff]
        %v852 = vld [vmem:[#allocation11 + $0x58] sm:$0xff]
        %v853 = vld [vmem:[#allocation11 + $0x60] sm:$0xff]
        %v854 = vld [vmem:[#allocation11 + $0x68] sm:$0xff]
        %v855 = vld [vmem:[#allocation11 + $0x70] sm:$0xff]
        %v856 = vld [vmem:[#allocation11 + $0x78] sm:$0xff]
        %857 = vmatprep.subr.mxu0 0.0
        %858 = vmatpush1.msra.mxu0 %v841
        %859 = vmatprep.subr.mxu0 0.0
        %860 = vmatpush1.msra.mxu0 %v842
        %861 = vmatprep.subr.mxu0 0.0
        %862 = vmatpush1.msra.mxu0 %v843
        %863 = vmatprep.subr.mxu0 0.0
        %864 = vmatpush1.msra.mxu0 %v844
        %865 = vmatprep.subr.mxu0 0.0
        %866 = vmatpush1.msra.mxu0 %v845
        %867 = vmatprep.subr.mxu0 0.0
        %868 = vmatpush1.msra.mxu0 %v846
        %869 = vmatprep.subr.mxu0 0.0
        %870 = vmatpush1.msra.mxu0 %v847
        %871 = vmatprep.subr.mxu0 0.0
        %872 = vmatpush1.msra.mxu0 %v848
        %873 = vmatprep.subr.mxu0 0.0
        %874 = vmatpush1.msra.mxu0 %v849
        %875 = vmatprep.subr.mxu0 0.0
        %876 = vmatpush1.msra.mxu0 %v850
        %877 = vmatprep.subr.mxu0 0.0
        %878 = vmatpush1.msra.mxu0 %v851
        %879 = vmatprep.subr.mxu0 0.0
        %880 = vmatpush1.msra.mxu0 %v852
        %881 = vmatprep.subr.mxu0 0.0
        %882 = vmatpush1.msra.mxu0 %v853
        %883 = vmatprep.subr.mxu0 0.0
        %884 = vmatpush1.msra.mxu0 %v854
        %885 = vmatprep.subr.mxu0 0.0
        %886 = vmatpush1.msra.mxu0 %v855
        %887 = vmatprep.subr.mxu0 0.0
        %888 = vmatpush1.msra.mxu0 %v856
        %889 = vmatprep.subr.mxu0 0.0
        %890 = vmatpush1.msra.mxu0 0.0
        %891 = vmatprep.subr.mxu0 0.0
        %892 = vmatpush1.msra.mxu0 0.0
        %893 = vmatprep.subr.mxu0 0.0
        %894 = vmatpush1.msra.mxu0 0.0
        %895 = vmatprep.subr.mxu0 0.0
        %896 = vmatpush1.msra.mxu0 0.0
        %897 = vmatprep.subr.mxu0 0.0
        %898 = vmatpush1.msra.mxu0 0.0
        %899 = vmatprep.subr.mxu0 0.0
        %900 = vmatpush1.msra.mxu0 0.0
        %901 = vmatprep.subr.mxu0 0.0
        %902 = vmatpush1.msra.mxu0 0.0
        %903 = vmatprep.subr.mxu0 0.0
        %904 = vmatpush1.msra.mxu0 0.0
        %905 = vmatprep.subr.mxu0 0.0
        %906 = vmatpush1.msra.mxu0 0.0
        %907 = vmatprep.subr.mxu0 0.0
        %908 = vmatpush1.msra.mxu0 0.0
        %909 = vmatprep.subr.mxu0 0.0
        %910 = vmatpush1.msra.mxu0 0.0
        %911 = vmatprep.subr.mxu0 0.0
        %912 = vmatpush1.msra.mxu0 0.0
        %913 = vmatprep.subr.mxu0 0.0
        %914 = vmatpush1.msra.mxu0 0.0
        %915 = vmatprep.subr.mxu0 0.0
        %916 = vmatpush1.msra.mxu0 0.0
        %917 = vmatprep.subr.mxu0 0.0
        %918 = vmatpush1.msra.mxu0 0.0
        %919 = vmatprep.subr.mxu0 0.0
        %920 = vmatpush1.msra.mxu0 0.0
        %921 = vmatprep.mubr.f32.mxu0 0.0
        %922 = vmatmul.mubr.f32.gmra.mrb[0].mxu0 %v824
        %v923 = vpop.f32.mrb[0].mxu0
        %v924 = vadd.f32 0.0, %v923
        %v925 = vpop.f32.mrb[0].mxu0
        %926 = vdwg.mxu0
        %927 = vmatprep.subr.mxu0 0.0
        %928 = vmatpush1.msra.mxu0 %v841
        %929 = vmatprep.subr.mxu0 0.0
        %930 = vmatpush1.msra.mxu0 %v842
        %931 = vmatprep.subr.mxu0 0.0
        %932 = vmatpush1.msra.mxu0 %v843
        %933 = vmatprep.subr.mxu0 0.0
        %934 = vmatpush1.msra.mxu0 %v844
        %935 = vmatprep.subr.mxu0 0.0
        %936 = vmatpush1.msra.mxu0 %v845
        %937 = vmatprep.subr.mxu0 0.0
        %938 = vmatpush1.msra.mxu0 %v846
        %939 = vmatprep.subr.mxu0 0.0
        %940 = vmatpush1.msra.mxu0 %v847
        %941 = vmatprep.subr.mxu0 0.0
        %942 = vmatpush1.msra.mxu0 %v848
        %943 = vmatprep.subr.mxu0 0.0
        %944 = vmatpush1.msra.mxu0 %v849
        %945 = vmatprep.subr.mxu0 0.0
        %946 = vmatpush1.msra.mxu0 %v850
        %947 = vmatprep.subr.mxu0 0.0
        %948 = vmatpush1.msra.mxu0 %v851
        %949 = vmatprep.subr.mxu0 0.0
        %950 = vmatpush1.msra.mxu0 %v852
        %951 = vmatprep.subr.mxu0 0.0
        %952 = vmatpush1.msra.mxu0 %v853
        %953 = vmatprep.subr.mxu0 0.0
        %954 = vmatpush1.msra.mxu0 %v854
        %955 = vmatprep.subr.mxu0 0.0
        %956 = vmatpush1.msra.mxu0 %v855
        %957 = vmatprep.subr.mxu0 0.0
        %958 = vmatpush1.msra.mxu0 %v856
        %959 = vmatprep.subr.mxu0 0.0
        %960 = vmatpush1.msra.mxu0 0.0
        %961 = vmatprep.subr.mxu0 0.0
        %962 = vmatpush1.msra.mxu0 0.0
        %963 = vmatprep.subr.mxu0 0.0
        %964 = vmatpush1.msra.mxu0 0.0
        %965 = vmatprep.subr.mxu0 0.0
        %966 = vmatpush1.msra.mxu0 0.0
        %967 = vmatprep.subr.mxu0 0.0
        %968 = vmatpush1.msra.mxu0 0.0
        %969 = vmatprep.subr.mxu0 0.0
        %970 = vmatpush1.msra.mxu0 0.0
        %971 = vmatprep.subr.mxu0 0.0
        %972 = vmatpush1.msra.mxu0 0.0
        %973 = vmatprep.subr.mxu0 0.0
        %974 = vmatpush1.msra.mxu0 0.0
        %975 = vmatprep.subr.mxu0 0.0
        %976 = vmatpush1.msra.mxu0 0.0
        %977 = vmatprep.subr.mxu0 0.0
        %978 = vmatpush1.msra.mxu0 0.0
        %979 = vmatprep.subr.mxu0 0.0
        %980 = vmatpush1.msra.mxu0 0.0
        %981 = vmatprep.subr.mxu0 0.0
        %982 = vmatpush1.msra.mxu0 0.0
        %983 = vmatprep.subr.mxu0 0.0
        %984 = vmatpush1.msra.mxu0 0.0
        %985 = vmatprep.subr.mxu0 0.0
        %986 = vmatpush1.msra.mxu0 0.0
        %987 = vmatprep.subr.mxu0 0.0
        %988 = vmatpush1.msra.mxu0 0.0
        %989 = vmatprep.subr.mxu0 0.0
        %990 = vmatpush1.msra.mxu0 0.0
        %991 = vmatprep.mubr.f32.mxu0 0.0
        %992 = vmatmul.mubr.f32.gmra.mrb[0].mxu0 %v840
        %v993 = vpop.f32.mrb[0].mxu0
        %v994 = vadd.f32 0.0, %v993
        %v995 = vpop.f32.mrb[0].mxu0
        %996 = vdwg.mxu0
        %v997 = vlaneseq
        %v998 = vshrl.u32 %v997, 7
        %v999 = vsub.s32 0, %v998
        %v1000 = vrot.slane %v924, %v999
        %v1001 = vmul.f32 %v788, %v1000
        %v1002 = vmul.f32 %v790, %v1000
        %1003 = vadd.xlane.f32.xlu0 %v1001
        %v1004 = vpop.xlane.xlu0 %1003
        %1005 = vadd.xlane.f32.xlu0 %v1002
        %v1006 = vpop.xlane.xlu0 %1005
        %v1007 = vstv %s544
        %v1008 = vadd.f32 %v1004, %v1007
        %v1009 = vadd.f32 %v1006, %v1007
        %v1010 = vlaneseq
        %v1011 = vshrl.u32 %v1010, 7
        %v1012 = vsub.s32 0, %v1011
        %v1013 = vrot.slane %v994, %v1012
        %v1014 = vmul.f32 %v710, %v1013
        %v1015 = vmul.f32 %v712, %v1013
        %1016 = vadd.xlane.f32.xlu0 %v1014
        %v1017 = vpop.xlane.xlu0 %1016
        %1018 = vadd.xlane.f32.xlu0 %v1015
        %v1019 = vpop.xlane.xlu0 %1018
        %v1020 = vadd.f32 %v1017, %v1007
        %v1021 = vadd.f32 %v1019, %v1007
        %v1022 = vmul.f32 %v789, %v1000
        %v1023 = vmul.f32 %v791, %v1000
        %1024 = vadd.xlane.f32.xlu0 %v1022
        %v1025 = vpop.xlane.xlu0 %1024
        %1026 = vadd.xlane.f32.xlu0 %v1023
        %v1027 = vpop.xlane.xlu0 %1026
        %v1028 = vadd.f32 %v1025, %v1007
        %v1029 = vadd.f32 %v1027, %v1007
        %v1030 = vmul.f32 %v711, %v1013
        %v1031 = vmul.f32 %v713, %v1013
        %1032 = vadd.xlane.f32.xlu0 %v1030
        %v1033 = vpop.xlane.xlu0 %1032
        %1034 = vadd.xlane.f32.xlu0 %v1031
        %v1035 = vpop.xlane.xlu0 %1034
        %v1036 = vadd.f32 %v1033, %v1007
        %v1037 = vadd.f32 %v1035, %v1007
        %v1040 = vlaneseq
        %v1041 = vand.u32 %v1040, 127
        %v1042 = vlaneseq
        %v1043 = vshrl.u32 %v1042, 7
        %v1044 = vsub.s32 %v1041, %v1043
        %v1045 = vrot.slane %v1008, %v1044
        %v1046 = vadd.s32 %v1041, 4294967288
        %v1047 = vlaneseq
        %v1048 = vshrl.u32 %v1047, 7
        %v1049 = vsub.s32 %v1046, %v1048
        %v1050 = vrot.slane %v1009, %v1049
        %vm1051 = vcmask 130112
        %v1052 = vsel %vm1051, %v1050, %v1045
        %v1056 = vlaneseq
        %v1057 = vshrl.u32 %v1056, 7
        %v1058 = vsub.s32 %v1041, %v1057
        %v1059 = vrot.slane %v1020, %v1058
        %v1060 = vlaneseq
        %v1061 = vshrl.u32 %v1060, 7
        %v1062 = vsub.s32 %v1046, %v1061
        %v1063 = vrot.slane %v1021, %v1062
        %v1064 = vsel %vm1051, %v1063, %v1059
        %v1068 = vlaneseq
        %v1069 = vshrl.u32 %v1068, 7
        %v1070 = vsub.s32 %v1041, %v1069
        %v1071 = vrot.slane %v1028, %v1070
        %v1072 = vlaneseq
        %v1073 = vshrl.u32 %v1072, 7
        %v1074 = vsub.s32 %v1046, %v1073
        %v1075 = vrot.slane %v1029, %v1074
        %v1076 = vsel %vm1051, %v1075, %v1071
        %v1080 = vlaneseq
        %v1081 = vshrl.u32 %v1080, 7
        %v1082 = vsub.s32 %v1041, %v1081
        %v1083 = vrot.slane %v1036, %v1082
        %v1084 = vlaneseq
        %v1085 = vshrl.u32 %v1084, 7
        %v1086 = vsub.s32 %v1046, %v1085
        %v1087 = vrot.slane %v1037, %v1086
        %v1088 = vsel %vm1051, %v1087, %v1083
        %vm1090 = vcmask 1040384
        %v1091 = vsel %vm1090, %v1052, %v1064
        %vm1092 = vcmask 1041408
        %v1093 = vsel %vm1092, %v1091, %v1076
        %vm1094 = vcmask 1042432
        %v1095 = vsel %vm1094, %v1093, %v1088
        %vm1096 = vcmask 125952
        %1097 = vst.msk [vmem:[%s526] sm:$0xf] %vm1096, %v1095
        %s1098 = sand.u32 %s227, 1
        %s1099 = scalar_lea.sflag [#allocation4], %s1098
        %s1100 = sand.u32 %s227, 1
        %s1101 = smul.addr %s1100, 4
        %s1102 = scalar_lea.vmem [#allocation13], %s1101
        %s1103 = sand.u32 %s36, 1
        %s1104 = scalar_lea.sflag [#allocation15], %s1103
        %s1105 = sand.u32 %s253, 1
        %s1106 = smul.addr %s1105, 16
        %s1107 = scalar_lea.vmem [#allocation14], %s1106
        %s1108 = sand.u32 %s36, 1
        %s1109 = scalar_lea.sflag [#allocation15], %s1108
        %s1110 = sand.u32 %s279, 1
        %s1111 = smul.addr %s1110, 16
        %s1112 = scalar_lea.vmem [#allocation16], %s1111
        // Predicated region
        $region77: #{tpu_custom_call.1} parent=51 // pred_check
          %p1113 = pneg %p237
        $region78: #{tpu_custom_call.1} parent=51 // pred_check_branch
          %1115 = sbr.rel (%p1113) target = $region80
        $region79: #{tpu_custom_call.1} parent=51 // pred_region
          %s1117 = ssub.s32 64, 64
          %1118 = vsyncadd %s1099, %s1117
          %s1119 = smul.addr %s36, 64
          %s1120 = scalar_lea.hbm %s8, %s1119
          %s1122 = sshll.u32 %s1102, 4
          %s1123 = int_to_ptr.vmem [resolvable:$true] %s1122
          %1125 = dma.vmem_to_hbm [thread:$0]  %s1123, 64, %s1120, %s1099
        $region80: #{tpu_custom_call.1} parent=51 // pred_fallthru
          _
        // Predicated region
        $region81: #{tpu_custom_call.1} parent=51 // pred_check
          %p1126 = pneg %p263
        $region82: #{tpu_custom_call.1} parent=51 // pred_check_branch
          %1128 = sbr.rel (%p1126) target = $region84
        $region83: #{tpu_custom_call.1} parent=51 // pred_region
          %s1130 = ssub.s32 256, 256
          %1131 = vsyncadd %s1104, %s1130
          %s1132 = smul.addr %s36, 2
          %s1133 = smul.addr %s1132, 128
          %s1134 = scalar_lea.hbm %s9, %s1133
          %s1135 = sshll.u32 %s1107, 4
          %s1136 = int_to_ptr.vmem [resolvable:$true] %s1135
          %1141 = dma.vmem_to_hbm [thread:$0]  %s1136, 256, %s1134, %s1104, 128, 128, 8
        $region84: #{tpu_custom_call.1} parent=51 // pred_fallthru
          _
        // Predicated region
        $region85: #{tpu_custom_call.1} parent=51 // pred_check
          %p1142 = pneg %p289
        $region86: #{tpu_custom_call.1} parent=51 // pred_check_branch
          %1144 = sbr.rel (%p1142) target = $region88
        $region87: #{tpu_custom_call.1} parent=51 // pred_region
          %s1146 = ssub.s32 256, 256
          %1147 = vsyncadd %s1109, %s1146
          %s1148 = smul.addr %s36, 2
          %s1149 = smul.addr %s1148, 128
          %s1150 = scalar_lea.hbm %s10, %s1149
          %s1151 = sshll.u32 %s1112, 4
          %s1152 = int_to_ptr.vmem [resolvable:$true] %s1151
          %1157 = dma.vmem_to_hbm [thread:$0]  %s1152, 256, %s1150, %s1109, 128, 128, 8
        $region88: #{tpu_custom_call.1} parent=51 // pred_fallthru
          _
      $region52: #{tpu_custom_call.1} parent=5 // pred_fallthru
        _
      %p1158 = scmp.le.s32.totalorder 2, %s31
      // Predicated region
      $region89: #{tpu_custom_call.1} parent=5 // pred_check
        %p1159 = pneg %p1158
      $region90: #{tpu_custom_call.1} parent=5 // pred_check_branch
        %1161 = sbr.rel (%p1159) target = $region92
      $region91: #{tpu_custom_call.1} parent=5 // pred_region
        %s1162 = ssub.s32 %s31, 2
        // Predicated region
        $region93: #{tpu_custom_call.1} parent=91 // pred_check
          %p1163 = pneg %p243
        $region94: #{tpu_custom_call.1} parent=91 // pred_check_branch
          %1165 = sbr.rel (%p1163) target = $region96
        $region95: #{tpu_custom_call.1} parent=91 // pred_region
          %s1166 = sand.u32 %s228, 1
          %s1167 = scalar_lea.sflag [#allocation4], %s1166
          %s1168 = sand.u32 %s228, 1
          %s1169 = smul.addr %s1168, 4
          %s1170 = scalar_lea.vmem [#allocation13], %s1169
          %1171 = dma.done %s1167, 64
        $region96: #{tpu_custom_call.1} parent=91 // pred_fallthru
          _
        // Predicated region
        $region97: #{tpu_custom_call.1} parent=91 // pred_check
          %p1172 = pneg %p269
        $region98: #{tpu_custom_call.1} parent=91 // pred_check_branch
          %1174 = sbr.rel (%p1172) target = $region100
        $region99: #{tpu_custom_call.1} parent=91 // pred_region
          %s1175 = sand.u32 %s37, 1
          %s1176 = scalar_lea.sflag [#allocation15], %s1175
          %s1177 = sand.u32 %s254, 1
          %s1178 = smul.addr %s1177, 16
          %s1179 = scalar_lea.vmem [#allocation14], %s1178
          %1180 = dma.done %s1176, 256
        $region100: #{tpu_custom_call.1} parent=91 // pred_fallthru
          _
        // Predicated region
        $region101: #{tpu_custom_call.1} parent=91 // pred_check
          %p1181 = pneg %p295
        $region102: #{tpu_custom_call.1} parent=91 // pred_check_branch
          %1183 = sbr.rel (%p1181) target = $region104
        $region103: #{tpu_custom_call.1} parent=91 // pred_region
          %s1184 = sand.u32 %s37, 1
          %s1185 = scalar_lea.sflag [#allocation15], %s1184
          %s1186 = sand.u32 %s280, 1
          %s1187 = smul.addr %s1186, 16
          %s1188 = scalar_lea.vmem [#allocation16], %s1187
          %1189 = dma.done %s1185, 256
        $region104: #{tpu_custom_call.1} parent=91 // pred_fallthru
          _
      $region92: #{tpu_custom_call.1} parent=5 // pred_fallthru
        _
    $region6: #{tpu_custom_call.1} parent=1 // loop_footer
      %s35 = sadd.s32 1, %s31
    $region7: #{tpu_custom_call.1} parent=1 // loop_footer_branch
      %30 = sbr.rel target = $region3
    $region8: #{tpu_custom_call.1} parent=1 // loop_exit
      _
    %1190 = vsyncpa [#allocation3], 1
    %s1191 = scalar_lea.sflag [#allocation3], 1
    %1192 = vsyncpa %s1191, 1
    %1193 = vsyncpa [#allocation7], 1
    %s1194 = scalar_lea.sflag [#allocation7], 1
    %1195 = vsyncpa %s1194, 1
    %1196 = vsyncpa [#allocation10], 1
    %1197 = vsyncpa [#allocation4], 1
    %s1198 = scalar_lea.sflag [#allocation4], 1
    %1199 = vsyncpa %s1198, 1
    %1200 = vsyncpa [#allocation15], 1
    %s1201 = scalar_lea.sflag [#allocation15], 1
    %1202 = vsyncpa %s1201, 1
    %1203 = vsyncpa [#allocation5], 1
    %s1204 = scalar_lea.sflag [#allocation5], 1
    %1205 = vsyncpa %s1204, 1

</llo_original>
